<compile_context>
chip_gen: v7x
topology: tpu7x:2x2x1
jax: 0.10.0
libtpu: 0.0.40
codegen_flags: <defaults>
</compile_context>

<pallas_src>
import math
import functools

import jax
import jax.numpy as jnp
from jax import lax
from jax.experimental import pallas as pl
from jax.experimental.pallas import tpu as pltpu


# A @ B.T without materializing the transpose (contract feature axes).
_FEAT_CONTRACT = (((1,), (1,)), ((), ()))


def _layernorm(h, g, b, eps=1e-5):
    mu = jnp.mean(h, axis=-1, keepdims=True)
    var = jnp.mean((h - mu) ** 2, axis=-1, keepdims=True)
    return (h - mu) * lax.rsqrt(var + eps) * g + b


def _softmax(s):
    m = jnp.max(s, axis=-1, keepdims=True)
    e = jnp.exp(s - m)
    return e * pl.reciprocal(jnp.sum(e, axis=-1, keepdims=True), approx=True)


def ts_encoder_kernel(
    x_ref,        # (S, D)      f32   one batch's sequence block
    wq_ref,       # (D, D)      f32   (1/sqrt(D) scale folded in)
    wk_ref,       # (D, D)      f32
    wv_ref,       # (D, D)      f32
    wq2_ref,      # (D, D)      f32   (scale folded in)
    wk2_ref,      # (D, D)      f32
    wv2_ref,      # (D, D)      f32
    wo_ref,       # (D, D)      f32
    wo2_ref,      # (D, D)      f32
    dft_fwd_ref,  # (2S, S)     f32   [C ; Sn]
    dft_inv_ref,  # (S, 2S)     f32   [C | Sn] / S
    w_ff1_ref,    # (D, d_ff)   f32
    b_ff1_ref,    # (S, d_ff)   f32   pre-broadcast
    w_ff2_ref,    # (d_ff, D)   f32
    w_out_ref,    # (D, N_pad)  f32   zero-padded, lane-dense
    b_out_ref,    # (S, N_pad)  f32   pre-broadcast, padded
    vecs_ref,     # (7, S, D)   f32   [ln1_g,ln1_b,ln2_g,ln2_b,lnf_g,lnf_b,b_ff2]
    out_ref,      # (S, N_pad)  f32
):
    f32 = jnp.float32
    x = x_ref[...]                                   # (S, D)
    S = x.shape[0]

    # ---- temporal (softmax) attention --------------------------------------
    q = jnp.dot(x, wq_ref[...], preferred_element_type=f32)
    k = jnp.dot(x, wk_ref[...], preferred_element_type=f32)
    v = jnp.dot(x, wv_ref[...], preferred_element_type=f32)
    s1 = lax.dot_general(q, k, _FEAT_CONTRACT, preferred_element_type=f32)
    a1 = _softmax(s1)
    ctx1 = jnp.dot(a1, v, preferred_element_type=f32)            # (S, D)

    # ---- frequency (Fourier/DFT) attention ----------------------------------
    q2 = jnp.dot(x, wq2_ref[...], preferred_element_type=f32)
    k2 = jnp.dot(x, wk2_ref[...], preferred_element_type=f32)
    v2 = jnp.dot(x, wv2_ref[...], preferred_element_type=f32)

    F = dft_fwd_ref[...]                                         # (2S, S)
    qf = jnp.dot(F, q2, preferred_element_type=f32)              # (2S, D)
    kf = jnp.dot(F, k2, preferred_element_type=f32)
    vf = jnp.dot(F, v2, preferred_element_type=f32)
    # real/imag split is a sublane slice at a multiple of 8 (cheap, no relayout)
    s2 = (lax.dot_general(qf[:S], kf[:S], _FEAT_CONTRACT, preferred_element_type=f32)
          + lax.dot_general(qf[S:], kf[S:], _FEAT_CONTRACT, preferred_element_type=f32))
    a2 = _softmax(s2)
    of = jnp.concatenate(
        [jnp.dot(a2, vf[:S], preferred_element_type=f32),
         jnp.dot(a2, vf[S:], preferred_element_type=f32)], axis=0)   # (2S, D)
    # inverse DFT (real part); 1/S folded into dft_inv
    ctx2 = jnp.dot(dft_inv_ref[...], of, preferred_element_type=f32)  # (S, D)

    # ---- output projections of both attentions (y1 + y2), residual, LN1 -----
    y = (jnp.dot(ctx1, wo_ref[...], preferred_element_type=f32)
         + jnp.dot(ctx2, wo2_ref[...], preferred_element_type=f32))
    h = _layernorm(x + y, vecs_ref[0], vecs_ref[1])

    # ---- feed-forward (1x1 conv == linear), ReLU, residual, LN2 --------------
    ff = jnp.dot(h, w_ff1_ref[...], preferred_element_type=f32) + b_ff1_ref[...]
    ff = jnp.maximum(ff, 0.0)
    ff = jnp.dot(ff, w_ff2_ref[...], preferred_element_type=f32) + vecs_ref[6]
    h = _layernorm(h + ff, vecs_ref[2], vecs_ref[3])

    # ---- encoder final norm + (lane-dense, padded) output projection --------
    h = _layernorm(h, vecs_ref[4], vecs_ref[5])
    out = jnp.dot(h, w_out_ref[...], preferred_element_type=f32) + b_out_ref[...]
    out_ref[...] = out.astype(out_ref.dtype)


def make_params(key, seq_len, num_nodes, d_model):
    d_ff = 4 * d_model
    ks = jax.random.split(key, 11)

    def lin(k, fan_in, shape):
        bound = 1.0 / math.sqrt(fan_in)
        return jax.random.uniform(k, shape, jnp.float32, -bound, bound)

    n = jnp.arange(seq_len, dtype=jnp.float32)
    ang = 2.0 * jnp.pi * jnp.outer(n, n) / seq_len
    return dict(
        wq=lin(ks[0], d_model, (d_model, d_model)),
        wk=lin(ks[1], d_model, (d_model, d_model)),
        wv=lin(ks[2], d_model, (d_model, d_model)),
        wo=lin(ks[3], d_model, (d_model, d_model)),
        wq2=lin(ks[4], d_model, (d_model, d_model)),
        wk2=lin(ks[5], d_model, (d_model, d_model)),
        wv2=lin(ks[6], d_model, (d_model, d_model)),
        wo2=lin(ks[7], d_model, (d_model, d_model)),
        dft_cos=jnp.cos(ang),
        dft_sin=-jnp.sin(ang),
        ln1_g=jnp.ones((1, d_model), jnp.float32),
        ln1_b=jnp.zeros((1, d_model), jnp.float32),
        w_ff1=lin(ks[8], d_model, (d_model, d_ff)),
        b_ff1=jnp.zeros((1, d_ff), jnp.float32),
        w_ff2=lin(ks[9], d_ff, (d_ff, d_model)),
        b_ff2=jnp.zeros((1, d_model), jnp.float32),
        ln2_g=jnp.ones((1, d_model), jnp.float32),
        ln2_b=jnp.zeros((1, d_model), jnp.float32),
        lnf_g=jnp.ones((1, d_model), jnp.float32),
        lnf_b=jnp.zeros((1, d_model), jnp.float32),
        w_out=lin(ks[10], d_model, (d_model, num_nodes)),
        b_out=jnp.zeros((1, num_nodes), jnp.float32),
    )


def pack_params(p):
    """Fold raw (PyTorch-like) params into the kernel layout (all f32)."""
    D = p["wq"].shape[0]
    S = p["dft_cos"].shape[0]
    N = p["w_out"].shape[1]
    d_ff = p["w_ff1"].shape[1]
    n_pad = max(128, ((N + 127) // 128) * 128)      # lane-dense output width
    scale = 1.0 / math.sqrt(D)

    dft_fwd = jnp.concatenate([p["dft_cos"], p["dft_sin"]], axis=0)        # (2S, S)
    dft_inv = jnp.concatenate([p["dft_cos"], p["dft_sin"]], axis=1) / S     # (S, 2S)

    w_out = jnp.zeros((D, n_pad), jnp.float32).at[:, :N].set(p["w_out"])
    b_out = jnp.zeros((1, n_pad), jnp.float32).at[:, :N].set(p["b_out"])
    b_out = jnp.broadcast_to(b_out, (S, n_pad)) + 0.0                       # materialize
    b_ff1 = jnp.broadcast_to(p["b_ff1"], (S, d_ff)) + 0.0

    vec_list = [p["ln1_g"], p["ln1_b"], p["ln2_g"], p["ln2_b"],
                p["lnf_g"], p["lnf_b"], p["b_ff2"]]
    vecs = jnp.stack([jnp.broadcast_to(v, (S, D)) for v in vec_list], axis=0)  # (7,S,D)

    return dict(
        wq=p["wq"] * scale, wk=p["wk"], wv=p["wv"],
        wq2=p["wq2"] * scale, wk2=p["wk2"], wv2=p["wv2"],
        wo=p["wo"], wo2=p["wo2"],
        dft_fwd=dft_fwd, dft_inv=dft_inv,
        w_ff1=p["w_ff1"], b_ff1=b_ff1, w_ff2=p["w_ff2"],
        w_out=w_out, b_out=b_out, vecs=vecs,
    )


_W_ORDER = ("wq", "wk", "wv", "wq2", "wk2", "wv2", "wo", "wo2",
            "dft_fwd", "dft_inv", "w_ff1", "b_ff1", "w_ff2",
            "w_out", "b_out", "vecs")


def _const_spec(shape):
    nd = len(shape)
    return pl.BlockSpec(shape, lambda b, _nd=nd: (0,) * _nd)


@functools.partial(jax.jit, static_argnames=("num_nodes",))
def ts_model_forward(x, kparams, *, num_nodes):
    B, S, D = x.shape
    x_flat = x.reshape(B * S, D)
    n_pad = kparams["w_out"].shape[1]
    w_args = [kparams[k] for k in _W_ORDER]

    out = pl.pallas_call(
        ts_encoder_kernel,
        out_shape=jax.ShapeDtypeStruct((B * S, n_pad), jnp.float32),
        grid=(B,),                                        # one program per batch
        in_specs=[pl.BlockSpec((S, D), lambda b: (b, 0))]
                 + [_const_spec(a.shape) for a in w_args],
        out_specs=pl.BlockSpec((S, n_pad), lambda b: (b, 0)),
        compiler_params=pltpu.CompilerParams(
            dimension_semantics=("parallel",)),           # 2nd TC on v7x
    )(x_flat, *w_args)
    return out[:, :num_nodes].reshape(B, S, num_nodes)


if __name__ == "__main__":
    batch, seq_len, num_nodes, d_model = 2, 8, 16, 32

    key = jax.random.PRNGKey(0)
    kx, kp = jax.random.split(key)
    x = jax.random.normal(kx, (batch, seq_len, d_model), jnp.float32)
    params = make_params(kp, seq_len, num_nodes, d_model)
    kernel_params = pack_params(params)

    out = ts_model_forward(x, kernel_params, num_nodes=num_nodes)
    out = jax.block_until_ready(out)
    assert out.shape == (batch, seq_len, num_nodes)
    assert bool(jnp.all(jnp.isfinite(out)))
    print("KERNEL_OK")
</pallas_src>

<mosaic_0001>
module attributes {stable_mosaic.version = 11 : i64} {
  func.func @ts_encoder_kernel(%arg0: i32, %arg1: memref<8x32xf32, #tpu.memory_space<vmem>>, %arg2: memref<32x32xf32, #tpu.memory_space<vmem>>, %arg3: memref<32x32xf32, #tpu.memory_space<vmem>>, %arg4: memref<32x32xf32, #tpu.memory_space<vmem>>, %arg5: memref<32x32xf32, #tpu.memory_space<vmem>>, %arg6: memref<32x32xf32, #tpu.memory_space<vmem>>, %arg7: memref<32x32xf32, #tpu.memory_space<vmem>>, %arg8: memref<32x32xf32, #tpu.memory_space<vmem>>, %arg9: memref<32x32xf32, #tpu.memory_space<vmem>>, %arg10: memref<16x8xf32, #tpu.memory_space<vmem>>, %arg11: memref<8x16xf32, #tpu.memory_space<vmem>>, %arg12: memref<32x128xf32, #tpu.memory_space<vmem>>, %arg13: memref<8x128xf32, #tpu.memory_space<vmem>>, %arg14: memref<128x32xf32, #tpu.memory_space<vmem>>, %arg15: memref<32x128xf32, #tpu.memory_space<vmem>>, %arg16: memref<8x128xf32, #tpu.memory_space<vmem>>, %arg17: memref<7x8x32xf32, #tpu.memory_space<vmem>>, %arg18: memref<8x128xf32, #tpu.memory_space<vmem>>) attributes {dimension_semantics = [#tpu.dimension_semantics<parallel>], iteration_bounds = array<i64: 2>, scalar_prefetch = 0 : i64, scratch_operands = 0 : i64, tpu.core_type = #tpu.core_type<tc>, window_params = [{transform_indices = @transform_0, window_bounds = array<i64: 8, 32>}, {pipeline_mode = #tpu.pipeline_mode<synchronous>, transform_indices = @transform_1, window_bounds = array<i64: 32, 32>}, {pipeline_mode = #tpu.pipeline_mode<synchronous>, transform_indices = @transform_2, window_bounds = array<i64: 32, 32>}, {pipeline_mode = #tpu.pipeline_mode<synchronous>, transform_indices = @transform_3, window_bounds = array<i64: 32, 32>}, {pipeline_mode = #tpu.pipeline_mode<synchronous>, transform_indices = @transform_4, window_bounds = array<i64: 32, 32>}, {pipeline_mode = #tpu.pipeline_mode<synchronous>, transform_indices = @transform_5, window_bounds = array<i64: 32, 32>}, {pipeline_mode = #tpu.pipeline_mode<synchronous>, transform_indices = @transform_6, window_bounds = array<i64: 32, 32>}, {pipeline_mode = #tpu.pipeline_mode<synchronous>, transform_indices = @transform_7, window_bounds = array<i64: 32, 32>}, {pipeline_mode = #tpu.pipeline_mode<synchronous>, transform_indices = @transform_8, window_bounds = array<i64: 32, 32>}, {pipeline_mode = #tpu.pipeline_mode<synchronous>, transform_indices = @transform_9, window_bounds = array<i64: 16, 8>}, {pipeline_mode = #tpu.pipeline_mode<synchronous>, transform_indices = @transform_10, window_bounds = array<i64: 8, 16>}, {pipeline_mode = #tpu.pipeline_mode<synchronous>, transform_indices = @transform_11, window_bounds = array<i64: 32, 128>}, {pipeline_mode = #tpu.pipeline_mode<synchronous>, transform_indices = @transform_12, window_bounds = array<i64: 8, 128>}, {pipeline_mode = #tpu.pipeline_mode<synchronous>, transform_indices = @transform_13, window_bounds = array<i64: 128, 32>}, {pipeline_mode = #tpu.pipeline_mode<synchronous>, transform_indices = @transform_14, window_bounds = array<i64: 32, 128>}, {pipeline_mode = #tpu.pipeline_mode<synchronous>, transform_indices = @transform_15, window_bounds = array<i64: 8, 128>}, {pipeline_mode = #tpu.pipeline_mode<synchronous>, transform_indices = @transform_16, window_bounds = array<i64: 7, 8, 32>}, {transform_indices = @transform_17, window_bounds = array<i64: 8, 128>}]} {
    %c0 = arith.constant 0 : index
    %c0_0 = arith.constant 0 : index
    %0 = vector.load %arg1[%c0, %c0_0] : memref<8x32xf32, #tpu.memory_space<vmem>>, vector<8x32xf32>
    %c0_1 = arith.constant 0 : index
    %c0_2 = arith.constant 0 : index
    %1 = vector.load %arg2[%c0_1, %c0_2] : memref<32x32xf32, #tpu.memory_space<vmem>>, vector<32x32xf32>
    %cst = arith.constant dense<0.000000e+00> : vector<8x32xf32>
    %2 = tpu.matmul %0, %1, %cst {dimension_numbers = #tpu.dot_dimension_numbers<[1], [0], [0], [1], [0, 0, 1, 1], [], []>} : vector<8x32xf32>, vector<32x32xf32>, vector<8x32xf32> -> vector<8x32xf32>
    %c0_3 = arith.constant 0 : index
    %c0_4 = arith.constant 0 : index
    %3 = vector.load %arg3[%c0_3, %c0_4] : memref<32x32xf32, #tpu.memory_space<vmem>>, vector<32x32xf32>
    %cst_5 = arith.constant dense<0.000000e+00> : vector<8x32xf32>
    %4 = tpu.matmul %0, %3, %cst_5 {dimension_numbers = #tpu.dot_dimension_numbers<[1], [0], [0], [1], [0, 0, 1, 1], [], []>} : vector<8x32xf32>, vector<32x32xf32>, vector<8x32xf32> -> vector<8x32xf32>
    %c0_6 = arith.constant 0 : index
    %c0_7 = arith.constant 0 : index
    %5 = vector.load %arg4[%c0_6, %c0_7] : memref<32x32xf32, #tpu.memory_space<vmem>>, vector<32x32xf32>
    %cst_8 = arith.constant dense<0.000000e+00> : vector<8x32xf32>
    %6 = tpu.matmul %0, %5, %cst_8 {dimension_numbers = #tpu.dot_dimension_numbers<[1], [0], [0], [1], [0, 0, 1, 1], [], []>} : vector<8x32xf32>, vector<32x32xf32>, vector<8x32xf32> -> vector<8x32xf32>
    %cst_9 = arith.constant dense<0.000000e+00> : vector<8x8xf32>
    %7 = tpu.matmul %2, %4, %cst_9 {dimension_numbers = #tpu.dot_dimension_numbers<[1], [1], [0], [0], [0, 0, 1, 0], [], []>} : vector<8x32xf32>, vector<8x32xf32>, vector<8x8xf32> -> vector<8x8xf32>
    %cst_10 = arith.constant dense<0xFF800000> : vector<8xf32>
    %8 = vector.multi_reduction <maximumf>, %7, %cst_10 [1] : vector<8x8xf32> to vector<8xf32>
    %9 = vector.shape_cast %8 : vector<8xf32> to vector<8x1xf32>
    %10 = vector.broadcast %9 : vector<8x1xf32> to vector<8x8xf32>
    %11 = arith.subf %7, %10 : vector<8x8xf32>
    %12 = math.exp %11 : vector<8x8xf32>
    %cst_11 = arith.constant dense<0.000000e+00> : vector<8xf32>
    %13 = vector.multi_reduction <add>, %12, %cst_11 [1] : vector<8x8xf32> to vector<8xf32>
    %14 = vector.shape_cast %13 : vector<8xf32> to vector<8x1xf32>
    %15 = tpu.reciprocal %14 {approx = true} : vector<8x1xf32> -> vector<8x1xf32>
    %16 = vector.broadcast %15 : vector<8x1xf32> to vector<8x8xf32>
    %17 = arith.mulf %12, %16 : vector<8x8xf32>
    %cst_12 = arith.constant dense<0.000000e+00> : vector<8x32xf32>
    %18 = tpu.matmul %17, %6, %cst_12 {dimension_numbers = #tpu.dot_dimension_numbers<[1], [0], [0], [1], [0, 0, 1, 1], [], []>} : vector<8x8xf32>, vector<8x32xf32>, vector<8x32xf32> -> vector<8x32xf32>
    %c0_13 = arith.constant 0 : index
    %c0_14 = arith.constant 0 : index
    %19 = vector.load %arg5[%c0_13, %c0_14] : memref<32x32xf32, #tpu.memory_space<vmem>>, vector<32x32xf32>
    %cst_15 = arith.constant dense<0.000000e+00> : vector<8x32xf32>
    %20 = tpu.matmul %0, %19, %cst_15 {dimension_numbers = #tpu.dot_dimension_numbers<[1], [0], [0], [1], [0, 0, 1, 1], [], []>} : vector<8x32xf32>, vector<32x32xf32>, vector<8x32xf32> -> vector<8x32xf32>
    %c0_16 = arith.constant 0 : index
    %c0_17 = arith.constant 0 : index
    %21 = vector.load %arg6[%c0_16, %c0_17] : memref<32x32xf32, #tpu.memory_space<vmem>>, vector<32x32xf32>
    %cst_18 = arith.constant dense<0.000000e+00> : vector<8x32xf32>
    %22 = tpu.matmul %0, %21, %cst_18 {dimension_numbers = #tpu.dot_dimension_numbers<[1], [0], [0], [1], [0, 0, 1, 1], [], []>} : vector<8x32xf32>, vector<32x32xf32>, vector<8x32xf32> -> vector<8x32xf32>
    %c0_19 = arith.constant 0 : index
    %c0_20 = arith.constant 0 : index
    %23 = vector.load %arg7[%c0_19, %c0_20] : memref<32x32xf32, #tpu.memory_space<vmem>>, vector<32x32xf32>
    %cst_21 = arith.constant dense<0.000000e+00> : vector<8x32xf32>
    %24 = tpu.matmul %0, %23, %cst_21 {dimension_numbers = #tpu.dot_dimension_numbers<[1], [0], [0], [1], [0, 0, 1, 1], [], []>} : vector<8x32xf32>, vector<32x32xf32>, vector<8x32xf32> -> vector<8x32xf32>
    %c0_22 = arith.constant 0 : index
    %c0_23 = arith.constant 0 : index
    %25 = vector.load %arg10[%c0_22, %c0_23] : memref<16x8xf32, #tpu.memory_space<vmem>>, vector<16x8xf32>
    %cst_24 = arith.constant dense<0.000000e+00> : vector<16x32xf32>
    %26 = tpu.matmul %25, %20, %cst_24 {dimension_numbers = #tpu.dot_dimension_numbers<[1], [0], [0], [1], [0, 0, 1, 1], [], []>} : vector<16x8xf32>, vector<8x32xf32>, vector<16x32xf32> -> vector<16x32xf32>
    %cst_25 = arith.constant dense<0.000000e+00> : vector<16x32xf32>
    %27 = tpu.matmul %25, %22, %cst_25 {dimension_numbers = #tpu.dot_dimension_numbers<[1], [0], [0], [1], [0, 0, 1, 1], [], []>} : vector<16x8xf32>, vector<8x32xf32>, vector<16x32xf32> -> vector<16x32xf32>
    %cst_26 = arith.constant dense<0.000000e+00> : vector<16x32xf32>
    %28 = tpu.matmul %25, %24, %cst_26 {dimension_numbers = #tpu.dot_dimension_numbers<[1], [0], [0], [1], [0, 0, 1, 1], [], []>} : vector<16x8xf32>, vector<8x32xf32>, vector<16x32xf32> -> vector<16x32xf32>
    %29 = vector.extract_strided_slice %26 {offsets = [0, 0], sizes = [8, 32], strides = [1, 1]} : vector<16x32xf32> to vector<8x32xf32>
    %30 = vector.extract_strided_slice %27 {offsets = [0, 0], sizes = [8, 32], strides = [1, 1]} : vector<16x32xf32> to vector<8x32xf32>
    %cst_27 = arith.constant dense<0.000000e+00> : vector<8x8xf32>
    %31 = tpu.matmul %29, %30, %cst_27 {dimension_numbers = #tpu.dot_dimension_numbers<[1], [1], [0], [0], [0, 0, 1, 0], [], []>} : vector<8x32xf32>, vector<8x32xf32>, vector<8x8xf32> -> vector<8x8xf32>
    %32 = vector.extract_strided_slice %26 {offsets = [8, 0], sizes = [8, 32], strides = [1, 1]} : vector<16x32xf32> to vector<8x32xf32>
    %33 = vector.extract_strided_slice %27 {offsets = [8, 0], sizes = [8, 32], strides = [1, 1]} : vector<16x32xf32> to vector<8x32xf32>
    %cst_28 = arith.constant dense<0.000000e+00> : vector<8x8xf32>
    %34 = tpu.matmul %32, %33, %cst_28 {dimension_numbers = #tpu.dot_dimension_numbers<[1], [1], [0], [0], [0, 0, 1, 0], [], []>} : vector<8x32xf32>, vector<8x32xf32>, vector<8x8xf32> -> vector<8x8xf32>
    %35 = arith.addf %31, %34 : vector<8x8xf32>
    %cst_29 = arith.constant dense<0xFF800000> : vector<8xf32>
    %36 = vector.multi_reduction <maximumf>, %35, %cst_29 [1] : vector<8x8xf32> to vector<8xf32>
    %37 = vector.shape_cast %36 : vector<8xf32> to vector<8x1xf32>
    %38 = vector.broadcast %37 : vector<8x1xf32> to vector<8x8xf32>
    %39 = arith.subf %35, %38 : vector<8x8xf32>
    %40 = math.exp %39 : vector<8x8xf32>
    %cst_30 = arith.constant dense<0.000000e+00> : vector<8xf32>
    %41 = vector.multi_reduction <add>, %40, %cst_30 [1] : vector<8x8xf32> to vector<8xf32>
    %42 = vector.shape_cast %41 : vector<8xf32> to vector<8x1xf32>
    %43 = tpu.reciprocal %42 {approx = true} : vector<8x1xf32> -> vector<8x1xf32>
    %44 = vector.broadcast %43 : vector<8x1xf32> to vector<8x8xf32>
    %45 = arith.mulf %40, %44 : vector<8x8xf32>
    %46 = vector.extract_strided_slice %28 {offsets = [0, 0], sizes = [8, 32], strides = [1, 1]} : vector<16x32xf32> to vector<8x32xf32>
    %cst_31 = arith.constant dense<0.000000e+00> : vector<8x32xf32>
    %47 = tpu.matmul %45, %46, %cst_31 {dimension_numbers = #tpu.dot_dimension_numbers<[1], [0], [0], [1], [0, 0, 1, 1], [], []>} : vector<8x8xf32>, vector<8x32xf32>, vector<8x32xf32> -> vector<8x32xf32>
    %48 = vector.extract_strided_slice %28 {offsets = [8, 0], sizes = [8, 32], strides = [1, 1]} : vector<16x32xf32> to vector<8x32xf32>
    %cst_32 = arith.constant dense<0.000000e+00> : vector<8x32xf32>
    %49 = tpu.matmul %45, %48, %cst_32 {dimension_numbers = #tpu.dot_dimension_numbers<[1], [0], [0], [1], [0, 0, 1, 1], [], []>} : vector<8x8xf32>, vector<8x32xf32>, vector<8x32xf32> -> vector<8x32xf32>
    %50 = tpu.concatenate %47, %49 in 0 : vector<8x32xf32>, vector<8x32xf32> -> vector<16x32xf32>
    %c0_33 = arith.constant 0 : index
    %c0_34 = arith.constant 0 : index
    %51 = vector.load %arg11[%c0_33, %c0_34] : memref<8x16xf32, #tpu.memory_space<vmem>>, vector<8x16xf32>
    %cst_35 = arith.constant dense<0.000000e+00> : vector<8x32xf32>
    %52 = tpu.matmul %51, %50, %cst_35 {dimension_numbers = #tpu.dot_dimension_numbers<[1], [0], [0], [1], [0, 0, 1, 1], [], []>} : vector<8x16xf32>, vector<16x32xf32>, vector<8x32xf32> -> vector<8x32xf32>
    %c0_36 = arith.constant 0 : index
    %c0_37 = arith.constant 0 : index
    %53 = vector.load %arg8[%c0_36, %c0_37] : memref<32x32xf32, #tpu.memory_space<vmem>>, vector<32x32xf32>
    %cst_38 = arith.constant dense<0.000000e+00> : vector<8x32xf32>
    %54 = tpu.matmul %18, %53, %cst_38 {dimension_numbers = #tpu.dot_dimension_numbers<[1], [0], [0], [1], [0, 0, 1, 1], [], []>} : vector<8x32xf32>, vector<32x32xf32>, vector<8x32xf32> -> vector<8x32xf32>
    %c0_39 = arith.constant 0 : index
    %c0_40 = arith.constant 0 : index
    %55 = vector.load %arg9[%c0_39, %c0_40] : memref<32x32xf32, #tpu.memory_space<vmem>>, vector<32x32xf32>
    %cst_41 = arith.constant dense<0.000000e+00> : vector<8x32xf32>
    %56 = tpu.matmul %52, %55, %cst_41 {dimension_numbers = #tpu.dot_dimension_numbers<[1], [0], [0], [1], [0, 0, 1, 1], [], []>} : vector<8x32xf32>, vector<32x32xf32>, vector<8x32xf32> -> vector<8x32xf32>
    %57 = arith.addf %54, %56 : vector<8x32xf32>
    %58 = arith.addf %0, %57 : vector<8x32xf32>
    %c0_42 = arith.constant 0 : index
    %c0_43 = arith.constant 0 : index
    %c0_44 = arith.constant 0 : index
    %59 = vector.load %arg17[%c0_42, %c0_43, %c0_44] : memref<7x8x32xf32, #tpu.memory_space<vmem>>, vector<1x8x32xf32>
    %60 = vector.shape_cast %59 : vector<1x8x32xf32> to vector<8x32xf32>
    %c1 = arith.constant 1 : index
    %c0_45 = arith.constant 0 : index
    %c0_46 = arith.constant 0 : index
    %61 = vector.load %arg17[%c1, %c0_45, %c0_46] : memref<7x8x32xf32, #tpu.memory_space<vmem>>, vector<1x8x32xf32>
    %62 = vector.shape_cast %61 : vector<1x8x32xf32> to vector<8x32xf32>
    %cst_47 = arith.constant dense<0.000000e+00> : vector<8xf32>
    %63 = vector.multi_reduction <add>, %58, %cst_47 [1] : vector<8x32xf32> to vector<8xf32>
    %64 = vector.shape_cast %63 : vector<8xf32> to vector<8x1xf32>
    %cst_48 = arith.constant 3.200000e+01 : f32
    %65 = vector.broadcast %cst_48 : f32 to vector<8x1xf32>
    %66 = arith.divf %64, %65 : vector<8x1xf32>
    %67 = vector.broadcast %66 : vector<8x1xf32> to vector<8x32xf32>
    %68 = arith.subf %58, %67 : vector<8x32xf32>
    %69 = arith.mulf %68, %68 : vector<8x32xf32>
    %cst_49 = arith.constant dense<0.000000e+00> : vector<8xf32>
    %70 = vector.multi_reduction <add>, %69, %cst_49 [1] : vector<8x32xf32> to vector<8xf32>
    %71 = vector.shape_cast %70 : vector<8xf32> to vector<8x1xf32>
    %cst_50 = arith.constant 3.200000e+01 : f32
    %72 = vector.broadcast %cst_50 : f32 to vector<8x1xf32>
    %73 = arith.divf %71, %72 : vector<8x1xf32>
    %74 = vector.broadcast %66 : vector<8x1xf32> to vector<8x32xf32>
    %75 = arith.subf %58, %74 : vector<8x32xf32>
    %cst_51 = arith.constant 9.99999974E-6 : f32
    %76 = vector.broadcast %cst_51 : f32 to vector<8x1xf32>
    %77 = arith.addf %73, %76 : vector<8x1xf32>
    %78 = math.rsqrt %77 : vector<8x1xf32>
    %79 = vector.broadcast %78 : vector<8x1xf32> to vector<8x32xf32>
    %80 = arith.mulf %75, %79 : vector<8x32xf32>
    %81 = arith.mulf %80, %60 : vector<8x32xf32>
    %82 = arith.addf %81, %62 : vector<8x32xf32>
    %c0_52 = arith.constant 0 : index
    %c0_53 = arith.constant 0 : index
    %83 = vector.load %arg12[%c0_52, %c0_53] : memref<32x128xf32, #tpu.memory_space<vmem>>, vector<32x128xf32>
    %cst_54 = arith.constant dense<0.000000e+00> : vector<8x128xf32>
    %84 = tpu.matmul %82, %83, %cst_54 {dimension_numbers = #tpu.dot_dimension_numbers<[1], [0], [0], [1], [0, 0, 1, 1], [], []>} : vector<8x32xf32>, vector<32x128xf32>, vector<8x128xf32> -> vector<8x128xf32>
    %c0_55 = arith.constant 0 : index
    %c0_56 = arith.constant 0 : index
    %85 = vector.load %arg13[%c0_55, %c0_56] : memref<8x128xf32, #tpu.memory_space<vmem>>, vector<8x128xf32>
    %86 = arith.addf %84, %85 : vector<8x128xf32>
    %cst_57 = arith.constant 0.000000e+00 : f32
    %87 = vector.broadcast %cst_57 : f32 to vector<8x128xf32>
    %88 = arith.maximumf %86, %87 : vector<8x128xf32>
    %c0_58 = arith.constant 0 : index
    %c0_59 = arith.constant 0 : index
    %89 = vector.load %arg14[%c0_58, %c0_59] : memref<128x32xf32, #tpu.memory_space<vmem>>, vector<128x32xf32>
    %cst_60 = arith.constant dense<0.000000e+00> : vector<8x32xf32>
    %90 = tpu.matmul %88, %89, %cst_60 {dimension_numbers = #tpu.dot_dimension_numbers<[1], [0], [0], [1], [0, 0, 1, 1], [], []>} : vector<8x128xf32>, vector<128x32xf32>, vector<8x32xf32> -> vector<8x32xf32>
    %c6 = arith.constant 6 : index
    %c0_61 = arith.constant 0 : index
    %c0_62 = arith.constant 0 : index
    %91 = vector.load %arg17[%c6, %c0_61, %c0_62] : memref<7x8x32xf32, #tpu.memory_space<vmem>>, vector<1x8x32xf32>
    %92 = vector.shape_cast %91 : vector<1x8x32xf32> to vector<8x32xf32>
    %93 = arith.addf %90, %92 : vector<8x32xf32>
    %94 = arith.addf %82, %93 : vector<8x32xf32>
    %c2 = arith.constant 2 : index
    %c0_63 = arith.constant 0 : index
    %c0_64 = arith.constant 0 : index
    %95 = vector.load %arg17[%c2, %c0_63, %c0_64] : memref<7x8x32xf32, #tpu.memory_space<vmem>>, vector<1x8x32xf32>
    %96 = vector.shape_cast %95 : vector<1x8x32xf32> to vector<8x32xf32>
    %c3 = arith.constant 3 : index
    %c0_65 = arith.constant 0 : index
    %c0_66 = arith.constant 0 : index
    %97 = vector.load %arg17[%c3, %c0_65, %c0_66] : memref<7x8x32xf32, #tpu.memory_space<vmem>>, vector<1x8x32xf32>
    %98 = vector.shape_cast %97 : vector<1x8x32xf32> to vector<8x32xf32>
    %cst_67 = arith.constant dense<0.000000e+00> : vector<8xf32>
    %99 = vector.multi_reduction <add>, %94, %cst_67 [1] : vector<8x32xf32> to vector<8xf32>
    %100 = vector.shape_cast %99 : vector<8xf32> to vector<8x1xf32>
    %cst_68 = arith.constant 3.200000e+01 : f32
    %101 = vector.broadcast %cst_68 : f32 to vector<8x1xf32>
    %102 = arith.divf %100, %101 : vector<8x1xf32>
    %103 = vector.broadcast %102 : vector<8x1xf32> to vector<8x32xf32>
    %104 = arith.subf %94, %103 : vector<8x32xf32>
    %105 = arith.mulf %104, %104 : vector<8x32xf32>
    %cst_69 = arith.constant dense<0.000000e+00> : vector<8xf32>
    %106 = vector.multi_reduction <add>, %105, %cst_69 [1] : vector<8x32xf32> to vector<8xf32>
    %107 = vector.shape_cast %106 : vector<8xf32> to vector<8x1xf32>
    %cst_70 = arith.constant 3.200000e+01 : f32
    %108 = vector.broadcast %cst_70 : f32 to vector<8x1xf32>
    %109 = arith.divf %107, %108 : vector<8x1xf32>
    %110 = vector.broadcast %102 : vector<8x1xf32> to vector<8x32xf32>
    %111 = arith.subf %94, %110 : vector<8x32xf32>
    %cst_71 = arith.constant 9.99999974E-6 : f32
    %112 = vector.broadcast %cst_71 : f32 to vector<8x1xf32>
    %113 = arith.addf %109, %112 : vector<8x1xf32>
    %114 = math.rsqrt %113 : vector<8x1xf32>
    %115 = vector.broadcast %114 : vector<8x1xf32> to vector<8x32xf32>
    %116 = arith.mulf %111, %115 : vector<8x32xf32>
    %117 = arith.mulf %116, %96 : vector<8x32xf32>
    %118 = arith.addf %117, %98 : vector<8x32xf32>
    %c4 = arith.constant 4 : index
    %c0_72 = arith.constant 0 : index
    %c0_73 = arith.constant 0 : index
    %119 = vector.load %arg17[%c4, %c0_72, %c0_73] : memref<7x8x32xf32, #tpu.memory_space<vmem>>, vector<1x8x32xf32>
    %120 = vector.shape_cast %119 : vector<1x8x32xf32> to vector<8x32xf32>
    %c5 = arith.constant 5 : index
    %c0_74 = arith.constant 0 : index
    %c0_75 = arith.constant 0 : index
    %121 = vector.load %arg17[%c5, %c0_74, %c0_75] : memref<7x8x32xf32, #tpu.memory_space<vmem>>, vector<1x8x32xf32>
    %122 = vector.shape_cast %121 : vector<1x8x32xf32> to vector<8x32xf32>
    %cst_76 = arith.constant dense<0.000000e+00> : vector<8xf32>
    %123 = vector.multi_reduction <add>, %118, %cst_76 [1] : vector<8x32xf32> to vector<8xf32>
    %124 = vector.shape_cast %123 : vector<8xf32> to vector<8x1xf32>
    %cst_77 = arith.constant 3.200000e+01 : f32
    %125 = vector.broadcast %cst_77 : f32 to vector<8x1xf32>
    %126 = arith.divf %124, %125 : vector<8x1xf32>
    %127 = vector.broadcast %126 : vector<8x1xf32> to vector<8x32xf32>
    %128 = arith.subf %118, %127 : vector<8x32xf32>
    %129 = arith.mulf %128, %128 : vector<8x32xf32>
    %cst_78 = arith.constant dense<0.000000e+00> : vector<8xf32>
    %130 = vector.multi_reduction <add>, %129, %cst_78 [1] : vector<8x32xf32> to vector<8xf32>
    %131 = vector.shape_cast %130 : vector<8xf32> to vector<8x1xf32>
    %cst_79 = arith.constant 3.200000e+01 : f32
    %132 = vector.broadcast %cst_79 : f32 to vector<8x1xf32>
    %133 = arith.divf %131, %132 : vector<8x1xf32>
    %134 = vector.broadcast %126 : vector<8x1xf32> to vector<8x32xf32>
    %135 = arith.subf %118, %134 : vector<8x32xf32>
    %cst_80 = arith.constant 9.99999974E-6 : f32
    %136 = vector.broadcast %cst_80 : f32 to vector<8x1xf32>
    %137 = arith.addf %133, %136 : vector<8x1xf32>
    %138 = math.rsqrt %137 : vector<8x1xf32>
    %139 = vector.broadcast %138 : vector<8x1xf32> to vector<8x32xf32>
    %140 = arith.mulf %135, %139 : vector<8x32xf32>
    %141 = arith.mulf %140, %120 : vector<8x32xf32>
    %142 = arith.addf %141, %122 : vector<8x32xf32>
    %c0_81 = arith.constant 0 : index
    %c0_82 = arith.constant 0 : index
    %143 = vector.load %arg15[%c0_81, %c0_82] : memref<32x128xf32, #tpu.memory_space<vmem>>, vector<32x128xf32>
    %cst_83 = arith.constant dense<0.000000e+00> : vector<8x128xf32>
    %144 = tpu.matmul %142, %143, %cst_83 {dimension_numbers = #tpu.dot_dimension_numbers<[1], [0], [0], [1], [0, 0, 1, 1], [], []>} : vector<8x32xf32>, vector<32x128xf32>, vector<8x128xf32> -> vector<8x128xf32>
    %c0_84 = arith.constant 0 : index
    %c0_85 = arith.constant 0 : index
    %145 = vector.load %arg16[%c0_84, %c0_85] : memref<8x128xf32, #tpu.memory_space<vmem>>, vector<8x128xf32>
    %146 = arith.addf %144, %145 : vector<8x128xf32>
    %c0_86 = arith.constant 0 : index
    %c0_87 = arith.constant 0 : index
    %147 = vector.load %arg18[%c0_86, %c0_87] : memref<8x128xf32, #tpu.memory_space<vmem>>, vector<8x128xf32>
    tpu.vector_store %arg18[%c0_86, %c0_87], %146 {strides = array<i32>} : memref<8x128xf32, #tpu.memory_space<vmem>>, vector<8x128xf32>,
    return
  }
  func.func @transform_0(%arg0: i32) -> (i32, i32) {
    %c0_i32 = arith.constant 0 : i32
    %c0_i32_0 = arith.constant 0 : i32
    return %arg0, %c0_i32 : i32, i32
  }
  func.func @transform_1(%arg0: i32) -> (i32, i32) {
    %c0_i32 = arith.constant 0 : i32
    %c0_i32_0 = arith.constant 0 : i32
    %c0_i32_1 = arith.constant 0 : i32
    return %c0_i32, %c0_i32_0 : i32, i32
  }
  func.func @transform_2(%arg0: i32) -> (i32, i32) {
    %c0_i32 = arith.constant 0 : i32
    %c0_i32_0 = arith.constant 0 : i32
    %c0_i32_1 = arith.constant 0 : i32
    return %c0_i32, %c0_i32_0 : i32, i32
  }
  func.func @transform_3(%arg0: i32) -> (i32, i32) {
    %c0_i32 = arith.constant 0 : i32
    %c0_i32_0 = arith.constant 0 : i32
    %c0_i32_1 = arith.constant 0 : i32
    return %c0_i32, %c0_i32_0 : i32, i32
  }
  func.func @transform_4(%arg0: i32) -> (i32, i32) {
    %c0_i32 = arith.constant 0 : i32
    %c0_i32_0 = arith.constant 0 : i32
    %c0_i32_1 = arith.constant 0 : i32
    return %c0_i32, %c0_i32_0 : i32, i32
  }
  func.func @transform_5(%arg0: i32) -> (i32, i32) {
    %c0_i32 = arith.constant 0 : i32
    %c0_i32_0 = arith.constant 0 : i32
    %c0_i32_1 = arith.constant 0 : i32
    return %c0_i32, %c0_i32_0 : i32, i32
  }
  func.func @transform_6(%arg0: i32) -> (i32, i32) {
    %c0_i32 = arith.constant 0 : i32
    %c0_i32_0 = arith.constant 0 : i32
    %c0_i32_1 = arith.constant 0 : i32
    return %c0_i32, %c0_i32_0 : i32, i32
  }
  func.func @transform_7(%arg0: i32) -> (i32, i32) {
    %c0_i32 = arith.constant 0 : i32
    %c0_i32_0 = arith.constant 0 : i32
    %c0_i32_1 = arith.constant 0 : i32
    return %c0_i32, %c0_i32_0 : i32, i32
  }
  func.func @transform_8(%arg0: i32) -> (i32, i32) {
    %c0_i32 = arith.constant 0 : i32
    %c0_i32_0 = arith.constant 0 : i32
    %c0_i32_1 = arith.constant 0 : i32
    return %c0_i32, %c0_i32_0 : i32, i32
  }
  func.func @transform_9(%arg0: i32) -> (i32, i32) {
    %c0_i32 = arith.constant 0 : i32
    %c0_i32_0 = arith.constant 0 : i32
    %c0_i32_1 = arith.constant 0 : i32
    return %c0_i32, %c0_i32_0 : i32, i32
  }
  func.func @transform_10(%arg0: i32) -> (i32, i32) {
    %c0_i32 = arith.constant 0 : i32
    %c0_i32_0 = arith.constant 0 : i32
    %c0_i32_1 = arith.constant 0 : i32
    return %c0_i32, %c0_i32_0 : i32, i32
  }
  func.func @transform_11(%arg0: i32) -> (i32, i32) {
    %c0_i32 = arith.constant 0 : i32
    %c0_i32_0 = arith.constant 0 : i32
    %c0_i32_1 = arith.constant 0 : i32
    return %c0_i32, %c0_i32_0 : i32, i32
  }
  func.func @transform_12(%arg0: i32) -> (i32, i32) {
    %c0_i32 = arith.constant 0 : i32
    %c0_i32_0 = arith.constant 0 : i32
    %c0_i32_1 = arith.constant 0 : i32
    return %c0_i32, %c0_i32_0 : i32, i32
  }
  func.func @transform_13(%arg0: i32) -> (i32, i32) {
    %c0_i32 = arith.constant 0 : i32
    %c0_i32_0 = arith.constant 0 : i32
    %c0_i32_1 = arith.constant 0 : i32
    return %c0_i32, %c0_i32_0 : i32, i32
  }
  func.func @transform_14(%arg0: i32) -> (i32, i32) {
    %c0_i32 = arith.constant 0 : i32
    %c0_i32_0 = arith.constant 0 : i32
    %c0_i32_1 = arith.constant 0 : i32
    return %c0_i32, %c0_i32_0 : i32, i32
  }
  func.func @transform_15(%arg0: i32) -> (i32, i32) {
    %c0_i32 = arith.constant 0 : i32
    %c0_i32_0 = arith.constant 0 : i32
    %c0_i32_1 = arith.constant 0 : i32
    return %c0_i32, %c0_i32_0 : i32, i32
  }
  func.func @transform_16(%arg0: i32) -> (i32, i32, i32) {
    %c0_i32 = arith.constant 0 : i32
    %c0_i32_0 = arith.constant 0 : i32
    %c0_i32_1 = arith.constant 0 : i32
    %c0_i32_2 = arith.constant 0 : i32
    return %c0_i32, %c0_i32_0, %c0_i32_1 : i32, i32, i32
  }
  func.func @transform_17(%arg0: i32) -> (i32, i32) {
    %c0_i32 = arith.constant 0 : i32
    %c0_i32_0 = arith.constant 0 : i32
    return %arg0, %c0_i32 : i32, i32
  }
}

</mosaic_0001>

<llo_original>
// kernel: ts_model_forward.1
$region0: #{ts_model_forward.1}
  #allocation0 [shape = 'u32[]', space=smem, size = 0x4, offset = 0x4, fixed_abs, tag = 'smem constant byte address 0x4 - core index']
  #allocation1 [shape = 'u32[144,128]{1,0:T(1,128)}', space=vmem, size = 0x12000, scoped, tag = 'internal scratch']
  %s0 = inlined_call_operand.hbm [shape: f32[16,32], index: 0, kind: input, shape index: {}]
  %s1 = inlined_call_operand.vmem [shape: f32[32,32], index: 1, kind: input, shape index: {}]
  %s2 = inlined_call_operand.vmem [shape: f32[32,32], index: 2, kind: input, shape index: {}]
  %s3 = inlined_call_operand.vmem [shape: f32[32,32], index: 3, kind: input, shape index: {}]
  %s4 = inlined_call_operand.vmem [shape: f32[32,32], index: 4, kind: input, shape index: {}]
  %s5 = inlined_call_operand.hbm [shape: f32[32,32], index: 5, kind: input, shape index: {}]
  %s6 = inlined_call_operand.hbm [shape: f32[32,32], index: 6, kind: input, shape index: {}]
  %s7 = inlined_call_operand.hbm [shape: f32[32,32], index: 7, kind: input, shape index: {}]
  %s8 = inlined_call_operand.hbm [shape: f32[32,32], index: 8, kind: input, shape index: {}]
  %s9 = inlined_call_operand.vmem [shape: f32[16,8], index: 9, kind: input, shape index: {}]
  %s10 = inlined_call_operand.vmem [shape: f32[8,16], index: 10, kind: input, shape index: {}]
  %s11 = inlined_call_operand.hbm [shape: f32[32,128], index: 11, kind: input, shape index: {}]
  %s12 = inlined_call_operand.hbm [shape: f32[8,128], index: 12, kind: input, shape index: {}]
  %s13 = inlined_call_operand.vmem [shape: f32[128,32], index: 13, kind: input, shape index: {}]
  %s14 = inlined_call_operand.hbm [shape: f32[32,128], index: 14, kind: input, shape index: {}]
  %s15 = inlined_call_operand.hbm [shape: f32[8,128], index: 15, kind: input, shape index: {}]
  %s16 = inlined_call_operand.vmem [shape: f32[7,8,32], index: 16, kind: input, shape index: {}]
  %s17 = inlined_call_operand.vmem [shape: f32[16,128], index: 17, kind: output, shape index: {}]
  %s18 = sld [smem:[#allocation0]]
  $region137: #{ts_model_forward.1} parent=0
    _
  %s20 = ssub.s32 1, %s18
  %s21 = scalar_select 0, %s20, %s18
  $region1: #{ts_model_forward.1} parent=0
    #allocation2 [shape = 'u8[8192]{0}', space=vmem, size = 0x2000, scoped, tag = 'input window, operand 0']
    #allocation3 [shape = 's32[2]{0}', space=sflag, size = 0x8, scoped, tag = 'scoped memory for ts_model_forward.1']
    #allocation4 [shape = 'u8[16384]{0}', space=vmem, size = 0x4000, scoped, tag = 'input window, operand 5, single buffered']
    #allocation5 [shape = 's32[1]{0}', space=sflag, size = 0x4, scoped, tag = 'scoped memory for ts_model_forward.1']
    #allocation6 [shape = 'u8[16384]{0}', space=vmem, size = 0x4000, scoped, tag = 'input window, operand 6, single buffered']
    #allocation7 [shape = 'u8[16384]{0}', space=vmem, size = 0x4000, scoped, tag = 'input window, operand 7, single buffered']
    #allocation8 [shape = 's32[1]{0}', space=sflag, size = 0x4, scoped, tag = 'scoped memory for ts_model_forward.1']
    #allocation9 [shape = 'u8[16384]{0}', space=vmem, size = 0x4000, scoped, tag = 'input window, operand 8, single buffered']
    #allocation10 [shape = 'u8[16384]{0}', space=vmem, size = 0x4000, scoped, tag = 'input window, operand 11, single buffered']
    #allocation11 [shape = 's32[1]{0}', space=sflag, size = 0x4, scoped, tag = 'scoped memory for ts_model_forward.1']
    #allocation12 [shape = 'u8[4096]{0}', space=vmem, size = 0x1000, scoped, tag = 'input window, operand 12, single buffered']
    #allocation13 [shape = 'u8[16384]{0}', space=vmem, size = 0x4000, scoped, tag = 'input window, operand 14, single buffered']
    #allocation14 [shape = 's32[1]{0}', space=sflag, size = 0x4, scoped, tag = 'scoped memory for ts_model_forward.1']
    #allocation15 [shape = 'u8[4096]{0}', space=vmem, size = 0x1000, scoped, tag = 'input window, operand 15, single buffered']
    %22 = vsyncpa [#allocation3], 0
    %s23 = scalar_lea.sflag [#allocation3], 1
    %24 = vsyncpa %s23, 0
    %25 = vsyncpa [#allocation5], 0
    %26 = vsyncpa [#allocation8], 0
    %27 = vsyncpa [#allocation11], 0
    %28 = vsyncpa [#allocation14], 0
    loop: start=0, step=1, limit=4
    $region2: #{ts_model_forward.1} parent=1 // loop_pre_header
      _
    $region3: #{ts_model_forward.1} parent=1 // loop_header
      %s30 = sphi 0, %s34
      %p31 = scmp.ge.s32.totalorder %s30, 4
      %s40 = sphi 0, %s42
      %s43 = sphi 0, %s40
      %s44 = sphi 0, %s43
      %s60 = sphi 0, %s44
      %s64 = sphi 0, %s64
      %s66 = sphi 0, %s64
      %s67 = sphi 0, %s66
      %s81 = sphi 0, %s67
      %s85 = sphi 0, %s85
      %s87 = sphi 0, %s85
      %s88 = sphi 0, %s87
      %s102 = sphi 0, %s88
      %s106 = sphi 0, %s106
      %s108 = sphi 0, %s106
      %s109 = sphi 0, %s108
      %s123 = sphi 0, %s109
      %s127 = sphi 0, %s127
      %s129 = sphi 0, %s127
      %s130 = sphi 0, %s129
      %s144 = sphi 0, %s130
      %s148 = sphi 0, %s148
      %s150 = sphi 0, %s148
      %s151 = sphi 0, %s150
      %s165 = sphi 0, %s151
      %s169 = sphi 0, %s169
      %s171 = sphi 0, %s169
      %s172 = sphi 0, %s171
      %s186 = sphi 0, %s172
      %s190 = sphi 0, %s190
      %s192 = sphi 0, %s190
      %s193 = sphi 0, %s192
      %s207 = sphi 0, %s193
      %s211 = sphi 0, %s211
      %s213 = sphi 0, %s211
      %s214 = sphi 0, %s213
      %s228 = sphi 0, %s214
      %s232 = sphi 0, %s232
      %s234 = sphi 0, %s232
      %s235 = sphi 0, %s234
      %s249 = sphi 0, %s235
      %s253 = sphi 0, %s253
      %s255 = sphi 0, %s253
      %s256 = sphi 0, %s255
      %s270 = sphi 0, %s256
      %s274 = sphi 0, %s274
      %s276 = sphi 0, %s274
      %s277 = sphi 0, %s276
      %s291 = sphi 0, %s277
      %s295 = sphi 0, %s295
      %s297 = sphi 0, %s295
      %s298 = sphi 0, %s297
      %s312 = sphi 0, %s298
      %s316 = sphi 0, %s316
      %s318 = sphi 0, %s316
      %s319 = sphi 0, %s318
      %s333 = sphi 0, %s319
      %s337 = sphi 0, %s337
      %s339 = sphi 0, %s337
      %s340 = sphi 0, %s339
      %s354 = sphi 0, %s340
      %s358 = sphi 0, %s358
      %s360 = sphi 0, %s358
      %s361 = sphi 0, %s360
      %s375 = sphi 0, %s361
      %s379 = sphi 0, %s379
      %s381 = sphi 0, %s379
      %s382 = sphi 0, %s381
      %s396 = sphi 0, %s382
      %s402 = sphi 0, %s404
      %s405 = sphi 0, %s402
      %s406 = sphi 0, %s405
      %s422 = sphi 0, %s406
    $region4: #{ts_model_forward.1} parent=1 // loop_header_branch
      %33 = sbr.rel (%p31) target = $region8
    $region5: #{ts_model_forward.1} parent=1 // loop_body
      %s35 = ssub.s32 %s30, 1
      %s36 = ssub.s32 %s30, 2
      %s37 = sadd.s32 %s30, 1
      %s38 = ssub.s32 %s30, %s37
      %p39 = scmp.eq.s32.totalorder %s38, 0
      %s41 = sadd.s32 %s40, 1
      %s42 = scalar_select %p39, %s40, %s41
      %p45 = pneg %p39
      %p46 = scmp.eq.s32.totalorder %s30, 1
      %p47 = por %p45, %p46
      %p48 = scmp.ne.s32.totalorder %s40, %s43
      %p49 = scmp.eq.s32.totalorder %s30, 0
      %p50 = por %p48, %p49
      %p51 = scmp.ne.s32.totalorder %s40, %s43
      %p52 = scmp.eq.s32.totalorder %s35, 1
      %p53 = por %p51, %p52
      %p54 = scmp.ne.s32.totalorder %s43, %s44
      %p55 = scmp.eq.s32.totalorder %s35, 0
      %p56 = por %p54, %p55
      %p57 = scmp.ne.s32.totalorder %s43, %s44
      %p58 = scmp.eq.s32.totalorder %s36, 1
      %p59 = por %p57, %p58
      %p61 = scmp.ne.s32.totalorder %s44, %s60
      %p62 = scmp.eq.s32.totalorder %s36, 0
      %p63 = por %p61, %p62
      %s65 = sadd.s32 %s64, 1
      %p68 = scmp.eq.s32.totalorder %s30, 1
      %p69 = scmp.ne.s32.totalorder %s64, %s66
      %p70 = scmp.eq.s32.totalorder %s30, 0
      %p71 = por %p69, %p70
      %p72 = scmp.ne.s32.totalorder %s64, %s66
      %p73 = scmp.eq.s32.totalorder %s35, 1
      %p74 = por %p72, %p73
      %p75 = scmp.ne.s32.totalorder %s66, %s67
      %p76 = scmp.eq.s32.totalorder %s35, 0
      %p77 = por %p75, %p76
      %p78 = scmp.ne.s32.totalorder %s66, %s67
      %p79 = scmp.eq.s32.totalorder %s36, 1
      %p80 = por %p78, %p79
      %p82 = scmp.ne.s32.totalorder %s67, %s81
      %p83 = scmp.eq.s32.totalorder %s36, 0
      %p84 = por %p82, %p83
      %s86 = sadd.s32 %s85, 1
      %p89 = scmp.eq.s32.totalorder %s30, 1
      %p90 = scmp.ne.s32.totalorder %s85, %s87
      %p91 = scmp.eq.s32.totalorder %s30, 0
      %p92 = por %p90, %p91
      %p93 = scmp.ne.s32.totalorder %s85, %s87
      %p94 = scmp.eq.s32.totalorder %s35, 1
      %p95 = por %p93, %p94
      %p96 = scmp.ne.s32.totalorder %s87, %s88
      %p97 = scmp.eq.s32.totalorder %s35, 0
      %p98 = por %p96, %p97
      %p99 = scmp.ne.s32.totalorder %s87, %s88
      %p100 = scmp.eq.s32.totalorder %s36, 1
      %p101 = por %p99, %p100
      %p103 = scmp.ne.s32.totalorder %s88, %s102
      %p104 = scmp.eq.s32.totalorder %s36, 0
      %p105 = por %p103, %p104
      %s107 = sadd.s32 %s106, 1
      %p110 = scmp.eq.s32.totalorder %s30, 1
      %p111 = scmp.ne.s32.totalorder %s106, %s108
      %p112 = scmp.eq.s32.totalorder %s30, 0
      %p113 = por %p111, %p112
      %p114 = scmp.ne.s32.totalorder %s106, %s108
      %p115 = scmp.eq.s32.totalorder %s35, 1
      %p116 = por %p114, %p115
      %p117 = scmp.ne.s32.totalorder %s108, %s109
      %p118 = scmp.eq.s32.totalorder %s35, 0
      %p119 = por %p117, %p118
      %p120 = scmp.ne.s32.totalorder %s108, %s109
      %p121 = scmp.eq.s32.totalorder %s36, 1
      %p122 = por %p120, %p121
      %p124 = scmp.ne.s32.totalorder %s109, %s123
      %p125 = scmp.eq.s32.totalorder %s36, 0
      %p126 = por %p124, %p125
      %s128 = sadd.s32 %s127, 1
      %p131 = scmp.eq.s32.totalorder %s30, 1
      %p132 = scmp.ne.s32.totalorder %s127, %s129
      %p133 = scmp.eq.s32.totalorder %s30, 0
      %p134 = por %p132, %p133
      %p135 = scmp.ne.s32.totalorder %s127, %s129
      %p136 = scmp.eq.s32.totalorder %s35, 1
      %p137 = por %p135, %p136
      %p138 = scmp.ne.s32.totalorder %s129, %s130
      %p139 = scmp.eq.s32.totalorder %s35, 0
      %p140 = por %p138, %p139
      %p141 = scmp.ne.s32.totalorder %s129, %s130
      %p142 = scmp.eq.s32.totalorder %s36, 1
      %p143 = por %p141, %p142
      %p145 = scmp.ne.s32.totalorder %s130, %s144
      %p146 = scmp.eq.s32.totalorder %s36, 0
      %p147 = por %p145, %p146
      %s149 = sadd.s32 %s148, 1
      %p152 = scmp.eq.s32.totalorder %s30, 1
      %p153 = scmp.ne.s32.totalorder %s148, %s150
      %p154 = scmp.eq.s32.totalorder %s30, 0
      %p155 = por %p153, %p154
      %p156 = scmp.ne.s32.totalorder %s148, %s150
      %p157 = scmp.eq.s32.totalorder %s35, 1
      %p158 = por %p156, %p157
      %p159 = scmp.ne.s32.totalorder %s150, %s151
      %p160 = scmp.eq.s32.totalorder %s35, 0
      %p161 = por %p159, %p160
      %p162 = scmp.ne.s32.totalorder %s150, %s151
      %p163 = scmp.eq.s32.totalorder %s36, 1
      %p164 = por %p162, %p163
      %p166 = scmp.ne.s32.totalorder %s151, %s165
      %p167 = scmp.eq.s32.totalorder %s36, 0
      %p168 = por %p166, %p167
      %s170 = sadd.s32 %s169, 1
      %p173 = scmp.eq.s32.totalorder %s30, 1
      %p174 = scmp.ne.s32.totalorder %s169, %s171
      %p175 = scmp.eq.s32.totalorder %s30, 0
      %p176 = por %p174, %p175
      %p177 = scmp.ne.s32.totalorder %s169, %s171
      %p178 = scmp.eq.s32.totalorder %s35, 1
      %p179 = por %p177, %p178
      %p180 = scmp.ne.s32.totalorder %s171, %s172
      %p181 = scmp.eq.s32.totalorder %s35, 0
      %p182 = por %p180, %p181
      %p183 = scmp.ne.s32.totalorder %s171, %s172
      %p184 = scmp.eq.s32.totalorder %s36, 1
      %p185 = por %p183, %p184
      %p187 = scmp.ne.s32.totalorder %s172, %s186
      %p188 = scmp.eq.s32.totalorder %s36, 0
      %p189 = por %p187, %p188
      %s191 = sadd.s32 %s190, 1
      %p194 = scmp.eq.s32.totalorder %s30, 1
      %p195 = scmp.ne.s32.totalorder %s190, %s192
      %p196 = scmp.eq.s32.totalorder %s30, 0
      %p197 = por %p195, %p196
      %p198 = scmp.ne.s32.totalorder %s190, %s192
      %p199 = scmp.eq.s32.totalorder %s35, 1
      %p200 = por %p198, %p199
      %p201 = scmp.ne.s32.totalorder %s192, %s193
      %p202 = scmp.eq.s32.totalorder %s35, 0
      %p203 = por %p201, %p202
      %p204 = scmp.ne.s32.totalorder %s192, %s193
      %p205 = scmp.eq.s32.totalorder %s36, 1
      %p206 = por %p204, %p205
      %p208 = scmp.ne.s32.totalorder %s193, %s207
      %p209 = scmp.eq.s32.totalorder %s36, 0
      %p210 = por %p208, %p209
      %s212 = sadd.s32 %s211, 1
      %p215 = scmp.eq.s32.totalorder %s30, 1
      %p216 = scmp.ne.s32.totalorder %s211, %s213
      %p217 = scmp.eq.s32.totalorder %s30, 0
      %p218 = por %p216, %p217
      %p219 = scmp.ne.s32.totalorder %s211, %s213
      %p220 = scmp.eq.s32.totalorder %s35, 1
      %p221 = por %p219, %p220
      %p222 = scmp.ne.s32.totalorder %s213, %s214
      %p223 = scmp.eq.s32.totalorder %s35, 0
      %p224 = por %p222, %p223
      %p225 = scmp.ne.s32.totalorder %s213, %s214
      %p226 = scmp.eq.s32.totalorder %s36, 1
      %p227 = por %p225, %p226
      %p229 = scmp.ne.s32.totalorder %s214, %s228
      %p230 = scmp.eq.s32.totalorder %s36, 0
      %p231 = por %p229, %p230
      %s233 = sadd.s32 %s232, 1
      %p236 = scmp.eq.s32.totalorder %s30, 1
      %p237 = scmp.ne.s32.totalorder %s232, %s234
      %p238 = scmp.eq.s32.totalorder %s30, 0
      %p239 = por %p237, %p238
      %p240 = scmp.ne.s32.totalorder %s232, %s234
      %p241 = scmp.eq.s32.totalorder %s35, 1
      %p242 = por %p240, %p241
      %p243 = scmp.ne.s32.totalorder %s234, %s235
      %p244 = scmp.eq.s32.totalorder %s35, 0
      %p245 = por %p243, %p244
      %p246 = scmp.ne.s32.totalorder %s234, %s235
      %p247 = scmp.eq.s32.totalorder %s36, 1
      %p248 = por %p246, %p247
      %p250 = scmp.ne.s32.totalorder %s235, %s249
      %p251 = scmp.eq.s32.totalorder %s36, 0
      %p252 = por %p250, %p251
      %s254 = sadd.s32 %s253, 1
      %p257 = scmp.eq.s32.totalorder %s30, 1
      %p258 = scmp.ne.s32.totalorder %s253, %s255
      %p259 = scmp.eq.s32.totalorder %s30, 0
      %p260 = por %p258, %p259
      %p261 = scmp.ne.s32.totalorder %s253, %s255
      %p262 = scmp.eq.s32.totalorder %s35, 1
      %p263 = por %p261, %p262
      %p264 = scmp.ne.s32.totalorder %s255, %s256
      %p265 = scmp.eq.s32.totalorder %s35, 0
      %p266 = por %p264, %p265
      %p267 = scmp.ne.s32.totalorder %s255, %s256
      %p268 = scmp.eq.s32.totalorder %s36, 1
      %p269 = por %p267, %p268
      %p271 = scmp.ne.s32.totalorder %s256, %s270
      %p272 = scmp.eq.s32.totalorder %s36, 0
      %p273 = por %p271, %p272
      %s275 = sadd.s32 %s274, 1
      %p278 = scmp.eq.s32.totalorder %s30, 1
      %p279 = scmp.ne.s32.totalorder %s274, %s276
      %p280 = scmp.eq.s32.totalorder %s30, 0
      %p281 = por %p279, %p280
      %p282 = scmp.ne.s32.totalorder %s274, %s276
      %p283 = scmp.eq.s32.totalorder %s35, 1
      %p284 = por %p282, %p283
      %p285 = scmp.ne.s32.totalorder %s276, %s277
      %p286 = scmp.eq.s32.totalorder %s35, 0
      %p287 = por %p285, %p286
      %p288 = scmp.ne.s32.totalorder %s276, %s277
      %p289 = scmp.eq.s32.totalorder %s36, 1
      %p290 = por %p288, %p289
      %p292 = scmp.ne.s32.totalorder %s277, %s291
      %p293 = scmp.eq.s32.totalorder %s36, 0
      %p294 = por %p292, %p293
      %s296 = sadd.s32 %s295, 1
      %p299 = scmp.eq.s32.totalorder %s30, 1
      %p300 = scmp.ne.s32.totalorder %s295, %s297
      %p301 = scmp.eq.s32.totalorder %s30, 0
      %p302 = por %p300, %p301
      %p303 = scmp.ne.s32.totalorder %s295, %s297
      %p304 = scmp.eq.s32.totalorder %s35, 1
      %p305 = por %p303, %p304
      %p306 = scmp.ne.s32.totalorder %s297, %s298
      %p307 = scmp.eq.s32.totalorder %s35, 0
      %p308 = por %p306, %p307
      %p309 = scmp.ne.s32.totalorder %s297, %s298
      %p310 = scmp.eq.s32.totalorder %s36, 1
      %p311 = por %p309, %p310
      %p313 = scmp.ne.s32.totalorder %s298, %s312
      %p314 = scmp.eq.s32.totalorder %s36, 0
      %p315 = por %p313, %p314
      %s317 = sadd.s32 %s316, 1
      %p320 = scmp.eq.s32.totalorder %s30, 1
      %p321 = scmp.ne.s32.totalorder %s316, %s318
      %p322 = scmp.eq.s32.totalorder %s30, 0
      %p323 = por %p321, %p322
      %p324 = scmp.ne.s32.totalorder %s316, %s318
      %p325 = scmp.eq.s32.totalorder %s35, 1
      %p326 = por %p324, %p325
      %p327 = scmp.ne.s32.totalorder %s318, %s319
      %p328 = scmp.eq.s32.totalorder %s35, 0
      %p329 = por %p327, %p328
      %p330 = scmp.ne.s32.totalorder %s318, %s319
      %p331 = scmp.eq.s32.totalorder %s36, 1
      %p332 = por %p330, %p331
      %p334 = scmp.ne.s32.totalorder %s319, %s333
      %p335 = scmp.eq.s32.totalorder %s36, 0
      %p336 = por %p334, %p335
      %s338 = sadd.s32 %s337, 1
      %p341 = scmp.eq.s32.totalorder %s30, 1
      %p342 = scmp.ne.s32.totalorder %s337, %s339
      %p343 = scmp.eq.s32.totalorder %s30, 0
      %p344 = por %p342, %p343
      %p345 = scmp.ne.s32.totalorder %s337, %s339
      %p346 = scmp.eq.s32.totalorder %s35, 1
      %p347 = por %p345, %p346
      %p348 = scmp.ne.s32.totalorder %s339, %s340
      %p349 = scmp.eq.s32.totalorder %s35, 0
      %p350 = por %p348, %p349
      %p351 = scmp.ne.s32.totalorder %s339, %s340
      %p352 = scmp.eq.s32.totalorder %s36, 1
      %p353 = por %p351, %p352
      %p355 = scmp.ne.s32.totalorder %s340, %s354
      %p356 = scmp.eq.s32.totalorder %s36, 0
      %p357 = por %p355, %p356
      %s359 = sadd.s32 %s358, 1
      %p362 = scmp.eq.s32.totalorder %s30, 1
      %p363 = scmp.ne.s32.totalorder %s358, %s360
      %p364 = scmp.eq.s32.totalorder %s30, 0
      %p365 = por %p363, %p364
      %p366 = scmp.ne.s32.totalorder %s358, %s360
      %p367 = scmp.eq.s32.totalorder %s35, 1
      %p368 = por %p366, %p367
      %p369 = scmp.ne.s32.totalorder %s360, %s361
      %p370 = scmp.eq.s32.totalorder %s35, 0
      %p371 = por %p369, %p370
      %p372 = scmp.ne.s32.totalorder %s360, %s361
      %p373 = scmp.eq.s32.totalorder %s36, 1
      %p374 = por %p372, %p373
      %p376 = scmp.ne.s32.totalorder %s361, %s375
      %p377 = scmp.eq.s32.totalorder %s36, 0
      %p378 = por %p376, %p377
      %s380 = sadd.s32 %s379, 1
      %p383 = scmp.eq.s32.totalorder %s30, 1
      %p384 = scmp.ne.s32.totalorder %s379, %s381
      %p385 = scmp.eq.s32.totalorder %s30, 0
      %p386 = por %p384, %p385
      %p387 = scmp.ne.s32.totalorder %s379, %s381
      %p388 = scmp.eq.s32.totalorder %s35, 1
      %p389 = por %p387, %p388
      %p390 = scmp.ne.s32.totalorder %s381, %s382
      %p391 = scmp.eq.s32.totalorder %s35, 0
      %p392 = por %p390, %p391
      %p393 = scmp.ne.s32.totalorder %s381, %s382
      %p394 = scmp.eq.s32.totalorder %s36, 1
      %p395 = por %p393, %p394
      %p397 = scmp.ne.s32.totalorder %s382, %s396
      %p398 = scmp.eq.s32.totalorder %s36, 0
      %p399 = por %p397, %p398
      %s400 = ssub.s32 %s30, %s37
      %p401 = scmp.eq.s32.totalorder %s400, 0
      %s403 = sadd.s32 %s402, 1
      %s404 = scalar_select %p401, %s402, %s403
      %p407 = pneg %p401
      %p408 = scmp.eq.s32.totalorder %s30, 1
      %p409 = por %p407, %p408
      %p410 = scmp.ne.s32.totalorder %s402, %s405
      %p411 = scmp.eq.s32.totalorder %s30, 0
      %p412 = por %p410, %p411
      %p413 = scmp.ne.s32.totalorder %s402, %s405
      %p414 = scmp.eq.s32.totalorder %s35, 1
      %p415 = por %p413, %p414
      %p416 = scmp.ne.s32.totalorder %s405, %s406
      %p417 = scmp.eq.s32.totalorder %s35, 0
      %p418 = por %p416, %p417
      %p419 = scmp.ne.s32.totalorder %s405, %s406
      %p420 = scmp.eq.s32.totalorder %s36, 1
      %p421 = por %p419, %p420
      %p423 = scmp.ne.s32.totalorder %s406, %s422
      %p424 = scmp.eq.s32.totalorder %s36, 0
      %p425 = por %p423, %p424
      %p426 = scmp.le.s32.totalorder 1, %s30
      %p427 = scmp.lt.s32.totalorder %s30, 3
      %p428 = pnand %p426, %p427
      %p429 = pneg %p428
      // Predicated region
      $region9: #{ts_model_forward.1} parent=5 // pred_check
        _
      $region10: #{ts_model_forward.1} parent=5 // pred_check_branch
        %431 = sbr.rel (%p428) target = $region12
      $region11: #{ts_model_forward.1} parent=5 // pred_region
        %s432 = ssub.s32 %s30, 1
        // Predicated region
        $region13: #{ts_model_forward.1} parent=11 // pred_check
          %p433 = pneg %p77
        $region14: #{ts_model_forward.1} parent=11 // pred_check_branch
          %435 = sbr.rel (%p433) target = $region16
        $region15: #{ts_model_forward.1} parent=11 // pred_region
          _
        $region16: #{ts_model_forward.1} parent=11 // pred_fallthru
          _
        // Predicated region
        $region17: #{ts_model_forward.1} parent=11 // pred_check
          %p436 = pneg %p98
        $region18: #{ts_model_forward.1} parent=11 // pred_check_branch
          %438 = sbr.rel (%p436) target = $region20
        $region19: #{ts_model_forward.1} parent=11 // pred_region
          _
        $region20: #{ts_model_forward.1} parent=11 // pred_fallthru
          _
        // Predicated region
        $region21: #{ts_model_forward.1} parent=11 // pred_check
          %p439 = pneg %p119
        $region22: #{ts_model_forward.1} parent=11 // pred_check_branch
          %441 = sbr.rel (%p439) target = $region24
        $region23: #{ts_model_forward.1} parent=11 // pred_region
          _
        $region24: #{ts_model_forward.1} parent=11 // pred_fallthru
          _
        // Predicated region
        $region25: #{ts_model_forward.1} parent=11 // pred_check
          %p442 = pneg %p140
        $region26: #{ts_model_forward.1} parent=11 // pred_check_branch
          %444 = sbr.rel (%p442) target = $region28
        $region27: #{ts_model_forward.1} parent=11 // pred_region
          _
        $region28: #{ts_model_forward.1} parent=11 // pred_fallthru
          _
        // Predicated region
        $region29: #{ts_model_forward.1} parent=11 // pred_check
          %p445 = pneg %p161
        $region30: #{ts_model_forward.1} parent=11 // pred_check_branch
          %447 = sbr.rel (%p445) target = $region32
        $region31: #{ts_model_forward.1} parent=11 // pred_region
          %s449 = ssub.s32 512, 512
          %450 = vsyncadd [#allocation5], %s449
          %s451 = sshll.u32 [#allocation4], 4
          %s452 = int_to_ptr.vmem [resolvable:$true] %s451
          %457 = dma.hbm_to_vmem [thread:$0]  %s5, 512, %s452, [#allocation5], 128, 128, 8
        $region32: #{ts_model_forward.1} parent=11 // pred_fallthru
          _
        // Predicated region
        $region33: #{ts_model_forward.1} parent=11 // pred_check
          %p458 = pneg %p182
        $region34: #{ts_model_forward.1} parent=11 // pred_check_branch
          %460 = sbr.rel (%p458) target = $region36
        $region35: #{ts_model_forward.1} parent=11 // pred_region
          %s462 = ssub.s32 512, 512
          %463 = vsyncadd [#allocation5], %s462
          %s464 = sshll.u32 [#allocation6], 4
          %s465 = int_to_ptr.vmem [resolvable:$true] %s464
          %470 = dma.hbm_to_vmem [thread:$0]  %s6, 512, %s465, [#allocation5], 128, 128, 8
        $region36: #{ts_model_forward.1} parent=11 // pred_fallthru
          _
        // Predicated region
        $region37: #{ts_model_forward.1} parent=11 // pred_check
          %p471 = pneg %p203
        $region38: #{ts_model_forward.1} parent=11 // pred_check_branch
          %473 = sbr.rel (%p471) target = $region40
        $region39: #{ts_model_forward.1} parent=11 // pred_region
          %s475 = ssub.s32 512, 512
          %476 = vsyncadd [#allocation8], %s475
          %s477 = sshll.u32 [#allocation7], 4
          %s478 = int_to_ptr.vmem [resolvable:$true] %s477
          %483 = dma.hbm_to_vmem [thread:$0]  %s7, 512, %s478, [#allocation8], 128, 128, 8
        $region40: #{ts_model_forward.1} parent=11 // pred_fallthru
          _
        // Predicated region
        $region41: #{ts_model_forward.1} parent=11 // pred_check
          %p484 = pneg %p224
        $region42: #{ts_model_forward.1} parent=11 // pred_check_branch
          %486 = sbr.rel (%p484) target = $region44
        $region43: #{ts_model_forward.1} parent=11 // pred_region
          %s488 = ssub.s32 512, 512
          %489 = vsyncadd [#allocation8], %s488
          %s490 = sshll.u32 [#allocation9], 4
          %s491 = int_to_ptr.vmem [resolvable:$true] %s490
          %496 = dma.hbm_to_vmem [thread:$0]  %s8, 512, %s491, [#allocation8], 128, 128, 8
        $region44: #{ts_model_forward.1} parent=11 // pred_fallthru
          _
        // Predicated region
        $region45: #{ts_model_forward.1} parent=11 // pred_check
          %p497 = pneg %p245
        $region46: #{ts_model_forward.1} parent=11 // pred_check_branch
          %499 = sbr.rel (%p497) target = $region48
        $region47: #{ts_model_forward.1} parent=11 // pred_region
          _
        $region48: #{ts_model_forward.1} parent=11 // pred_fallthru
          _
        // Predicated region
        $region49: #{ts_model_forward.1} parent=11 // pred_check
          %p500 = pneg %p266
        $region50: #{ts_model_forward.1} parent=11 // pred_check_branch
          %502 = sbr.rel (%p500) target = $region52
        $region51: #{ts_model_forward.1} parent=11 // pred_region
          _
        $region52: #{ts_model_forward.1} parent=11 // pred_fallthru
          _
        // Predicated region
        $region53: #{ts_model_forward.1} parent=11 // pred_check
          %p503 = pneg %p287
        $region54: #{ts_model_forward.1} parent=11 // pred_check_branch
          %505 = sbr.rel (%p503) target = $region56
        $region55: #{ts_model_forward.1} parent=11 // pred_region
          %s507 = ssub.s32 512, 512
          %508 = vsyncadd [#allocation11], %s507
          %s509 = sshll.u32 [#allocation10], 4
          %s510 = int_to_ptr.vmem [resolvable:$true] %s509
          %515 = dma.hbm_to_vmem [thread:$0]  %s11, 512, %s510, [#allocation11], 128, 128, 8
        $region56: #{ts_model_forward.1} parent=11 // pred_fallthru
          _
        // Predicated region
        $region57: #{ts_model_forward.1} parent=11 // pred_check
          %p516 = pneg %p308
        $region58: #{ts_model_forward.1} parent=11 // pred_check_branch
          %518 = sbr.rel (%p516) target = $region60
        $region59: #{ts_model_forward.1} parent=11 // pred_region
          %s520 = ssub.s32 128, 128
          %521 = vsyncadd [#allocation11], %s520
          %s523 = sshll.u32 [#allocation12], 4
          %s524 = int_to_ptr.vmem [resolvable:$true] %s523
          %526 = dma.hbm_to_vmem [thread:$0]  %s12, 128, %s524, [#allocation11]
        $region60: #{ts_model_forward.1} parent=11 // pred_fallthru
          _
        // Predicated region
        $region61: #{ts_model_forward.1} parent=11 // pred_check
          %p527 = pneg %p329
        $region62: #{ts_model_forward.1} parent=11 // pred_check_branch
          %529 = sbr.rel (%p527) target = $region64
        $region63: #{ts_model_forward.1} parent=11 // pred_region
          _
        $region64: #{ts_model_forward.1} parent=11 // pred_fallthru
          _
        // Predicated region
        $region65: #{ts_model_forward.1} parent=11 // pred_check
          %p530 = pneg %p350
        $region66: #{ts_model_forward.1} parent=11 // pred_check_branch
          %532 = sbr.rel (%p530) target = $region68
        $region67: #{ts_model_forward.1} parent=11 // pred_region
          %s534 = ssub.s32 512, 512
          %535 = vsyncadd [#allocation14], %s534
          %s536 = sshll.u32 [#allocation13], 4
          %s537 = int_to_ptr.vmem [resolvable:$true] %s536
          %542 = dma.hbm_to_vmem [thread:$0]  %s14, 512, %s537, [#allocation14], 128, 128, 8
        $region68: #{ts_model_forward.1} parent=11 // pred_fallthru
          _
        // Predicated region
        $region69: #{ts_model_forward.1} parent=11 // pred_check
          %p543 = pneg %p371
        $region70: #{ts_model_forward.1} parent=11 // pred_check_branch
          %545 = sbr.rel (%p543) target = $region72
        $region71: #{ts_model_forward.1} parent=11 // pred_region
          %s547 = ssub.s32 128, 128
          %548 = vsyncadd [#allocation14], %s547
          %s550 = sshll.u32 [#allocation15], 4
          %s551 = int_to_ptr.vmem [resolvable:$true] %s550
          %553 = dma.hbm_to_vmem [thread:$0]  %s15, 128, %s551, [#allocation14]
        $region72: #{ts_model_forward.1} parent=11 // pred_fallthru
          _
        // Predicated region
        $region73: #{ts_model_forward.1} parent=11 // pred_check
          %p554 = pneg %p392
        $region74: #{ts_model_forward.1} parent=11 // pred_check_branch
          %556 = sbr.rel (%p554) target = $region76
        $region75: #{ts_model_forward.1} parent=11 // pred_region
          _
        $region76: #{ts_model_forward.1} parent=11 // pred_fallthru
          _
      $region12: #{ts_model_forward.1} parent=5 // pred_fallthru
        _
      %p557 = scmp.lt.s32.totalorder %s30, 2
      // Predicated region
      $region77: #{ts_model_forward.1} parent=5 // pred_check
        %p558 = pneg %p557
      $region78: #{ts_model_forward.1} parent=5 // pred_check_branch
        %560 = sbr.rel (%p558) target = $region80
      $region79: #{ts_model_forward.1} parent=5 // pred_region
        // Predicated region
        $region81: #{ts_model_forward.1} parent=79 // pred_check
          %p561 = pneg %p50
        $region82: #{ts_model_forward.1} parent=79 // pred_check_branch
          %563 = sbr.rel (%p561) target = $region84
        $region83: #{ts_model_forward.1} parent=79 // pred_region
          %s564 = sand.u32 %s40, 1
          %s565 = scalar_lea.sflag [#allocation3], %s564
          %s566 = sand.u32 %s40, 1
          %s567 = smul.addr %s566, 8
          %s568 = scalar_lea.vmem [#allocation2], %s567
          %s570 = ssub.s32 128, 128
          %571 = vsyncadd %s565, %s570
          %s572 = smul.addr %s30, 128
          %s573 = scalar_lea.hbm %s0, %s572
          %s575 = sshll.u32 %s568, 4
          %s576 = int_to_ptr.vmem [resolvable:$true] %s575
          %578 = dma.hbm_to_vmem [thread:$0]  %s573, 128, %s576, %s565
        $region84: #{ts_model_forward.1} parent=79 // pred_fallthru
          _
      $region80: #{ts_model_forward.1} parent=5 // pred_fallthru
        _
      %p579 = scmp.le.s32.totalorder 1, %s30
      %p580 = scmp.lt.s32.totalorder %s30, 3
      %p581 = pnand %p579, %p580
      %p582 = pneg %p581
      // Predicated region
      $region85: #{ts_model_forward.1} parent=5 // pred_check
        _
      $region86: #{ts_model_forward.1} parent=5 // pred_check_branch
        %584 = sbr.rel (%p581) target = $region88
      $region87: #{ts_model_forward.1} parent=5 // pred_region
        %s585 = ssub.s32 %s30, 1
        %s586 = sand.u32 %s43, 1
        %s587 = scalar_lea.sflag [#allocation3], %s586
        %s588 = sand.u32 %s43, 1
        %s589 = smul.addr %s588, 8
        %s590 = scalar_lea.vmem [#allocation2], %s589
        // Predicated region
        $region89: #{ts_model_forward.1} parent=87 // pred_check
          %p591 = pneg %p56
        $region90: #{ts_model_forward.1} parent=87 // pred_check_branch
          %593 = sbr.rel (%p591) target = $region92
        $region91: #{ts_model_forward.1} parent=87 // pred_region
          %594 = dma.done %s587, 128
        $region92: #{ts_model_forward.1} parent=87 // pred_fallthru
          _
        // Predicated region
        $region93: #{ts_model_forward.1} parent=87 // pred_check
          %p595 = pneg %p161
        $region94: #{ts_model_forward.1} parent=87 // pred_check_branch
          %597 = sbr.rel (%p595) target = $region96
        $region95: #{ts_model_forward.1} parent=87 // pred_region
          %598 = dma.done [#allocation5], 512
        $region96: #{ts_model_forward.1} parent=87 // pred_fallthru
          _
        // Predicated region
        $region97: #{ts_model_forward.1} parent=87 // pred_check
          %p599 = pneg %p182
        $region98: #{ts_model_forward.1} parent=87 // pred_check_branch
          %601 = sbr.rel (%p599) target = $region100
        $region99: #{ts_model_forward.1} parent=87 // pred_region
          %602 = dma.done [#allocation5], 512
        $region100: #{ts_model_forward.1} parent=87 // pred_fallthru
          _
        // Predicated region
        $region101: #{ts_model_forward.1} parent=87 // pred_check
          %p603 = pneg %p203
        $region102: #{ts_model_forward.1} parent=87 // pred_check_branch
          %605 = sbr.rel (%p603) target = $region104
        $region103: #{ts_model_forward.1} parent=87 // pred_region
          %606 = dma.done [#allocation8], 512
        $region104: #{ts_model_forward.1} parent=87 // pred_fallthru
          _
        // Predicated region
        $region105: #{ts_model_forward.1} parent=87 // pred_check
          %p607 = pneg %p224
        $region106: #{ts_model_forward.1} parent=87 // pred_check_branch
          %609 = sbr.rel (%p607) target = $region108
        $region107: #{ts_model_forward.1} parent=87 // pred_region
          %610 = dma.done [#allocation8], 512
        $region108: #{ts_model_forward.1} parent=87 // pred_fallthru
          _
        // Predicated region
        $region109: #{ts_model_forward.1} parent=87 // pred_check
          %p611 = pneg %p287
        $region110: #{ts_model_forward.1} parent=87 // pred_check_branch
          %613 = sbr.rel (%p611) target = $region112
        $region111: #{ts_model_forward.1} parent=87 // pred_region
          %614 = dma.done [#allocation11], 512
        $region112: #{ts_model_forward.1} parent=87 // pred_fallthru
          _
        // Predicated region
        $region113: #{ts_model_forward.1} parent=87 // pred_check
          %p615 = pneg %p308
        $region114: #{ts_model_forward.1} parent=87 // pred_check_branch
          %617 = sbr.rel (%p615) target = $region116
        $region115: #{ts_model_forward.1} parent=87 // pred_region
          %618 = dma.done [#allocation11], 128
        $region116: #{ts_model_forward.1} parent=87 // pred_fallthru
          _
        // Predicated region
        $region117: #{ts_model_forward.1} parent=87 // pred_check
          %p619 = pneg %p350
        $region118: #{ts_model_forward.1} parent=87 // pred_check_branch
          %621 = sbr.rel (%p619) target = $region120
        $region119: #{ts_model_forward.1} parent=87 // pred_region
          %622 = dma.done [#allocation14], 512
        $region120: #{ts_model_forward.1} parent=87 // pred_fallthru
          _
        // Predicated region
        $region121: #{ts_model_forward.1} parent=87 // pred_check
          %p623 = pneg %p371
        $region122: #{ts_model_forward.1} parent=87 // pred_check_branch
          %625 = sbr.rel (%p623) target = $region124
        $region123: #{ts_model_forward.1} parent=87 // pred_region
          %626 = dma.done [#allocation14], 128
        $region124: #{ts_model_forward.1} parent=87 // pred_fallthru
          _
        %s627 = sand.u32 %s43, 1
        %s628 = scalar_lea.sflag [#allocation3], %s627
        %s629 = sand.u32 %s43, 1
        %s630 = smul.addr %s629, 8
        %s631 = scalar_lea.vmem [#allocation2], %s630
        %p632 = pneg %p56
        %p633 = pneg %p53
        %p634 = pneg %p77
        %p635 = pneg %p74
        %p636 = pneg %p98
        %p637 = pneg %p95
        %p638 = pneg %p119
        %p639 = pneg %p116
        %p640 = pneg %p140
        %p641 = pneg %p137
        %p642 = pneg %p161
        %p643 = pneg %p158
        %p644 = pneg %p182
        %p645 = pneg %p179
        %p646 = pneg %p203
        %p647 = pneg %p200
        %p648 = pneg %p224
        %p649 = pneg %p221
        %p650 = pneg %p245
        %p651 = pneg %p242
        %p652 = pneg %p266
        %p653 = pneg %p263
        %p654 = pneg %p287
        %p655 = pneg %p284
        %p656 = pneg %p308
        %p657 = pneg %p305
        %p658 = pneg %p329
        %p659 = pneg %p326
        %p660 = pneg %p350
        %p661 = pneg %p347
        %p662 = pneg %p371
        %p663 = pneg %p368
        %p664 = pneg %p392
        %p665 = pneg %p389
        %p666 = pneg %p418
        %p667 = pneg %p415
        %p668 = scmp.lt.s32.totalorder %s35, 1
        %s669 = scalar_select %p668, %s35, 1
        %s670 = smul.addr %s669, 8
        %s671 = scalar_lea.vmem %s17, %s670
        %p672 = scmp.lt.s32.totalorder %s35, 1
        %s673 = scalar_select %p672, %s35, 1
        %s674 = smul.addr %s673, 8
        %s675 = scalar_lea.vmem %s17, %s674
        %v676 = vld [vmem:[%s590] sm:$0xff]
        %v677 = vld [vmem:[%s1] sm:$0xff]
        %v678 = vld [vmem:[%s1 + $0x8] sm:$0xff]
        %v679 = vld [vmem:[%s1 + $0x10] sm:$0xff]
        %v680 = vld [vmem:[%s1 + $0x18] sm:$0xff]
        %vm681 = vcmask 261120
        %v683 = vsel %vm681, %v676, 0
        %685 = vmatprep.subr.mxu0 0.0
        %686 = vmatpush1.msra.mxu0 %v677
        %687 = vmatprep.subr.mxu0 0.0
        %688 = vmatpush1.msra.mxu0 %v678
        %689 = vmatprep.subr.mxu0 0.0
        %690 = vmatpush1.msra.mxu0 %v679
        %691 = vmatprep.subr.mxu0 0.0
        %692 = vmatpush1.msra.mxu0 %v680
        %693 = vmatprep.subr.mxu0 0.0
        %694 = vmatpush1.msra.mxu0 0.0
        %695 = vmatprep.subr.mxu0 0.0
        %696 = vmatpush1.msra.mxu0 0.0
        %697 = vmatprep.subr.mxu0 0.0
        %698 = vmatpush1.msra.mxu0 0.0
        %699 = vmatprep.subr.mxu0 0.0
        %700 = vmatpush1.msra.mxu0 0.0
        %701 = vmatprep.subr.mxu0 0.0
        %702 = vmatpush1.msra.mxu0 0.0
        %703 = vmatprep.subr.mxu0 0.0
        %704 = vmatpush1.msra.mxu0 0.0
        %705 = vmatprep.subr.mxu0 0.0
        %706 = vmatpush1.msra.mxu0 0.0
        %707 = vmatprep.subr.mxu0 0.0
        %708 = vmatpush1.msra.mxu0 0.0
        %709 = vmatprep.subr.mxu0 0.0
        %710 = vmatpush1.msra.mxu0 0.0
        %711 = vmatprep.subr.mxu0 0.0
        %712 = vmatpush1.msra.mxu0 0.0
        %713 = vmatprep.subr.mxu0 0.0
        %714 = vmatpush1.msra.mxu0 0.0
        %715 = vmatprep.subr.mxu0 0.0
        %716 = vmatpush1.msra.mxu0 0.0
        %717 = vmatprep.subr.mxu0 0.0
        %718 = vmatpush1.msra.mxu0 0.0
        %719 = vmatprep.subr.mxu0 0.0
        %720 = vmatpush1.msra.mxu0 0.0
        %721 = vmatprep.subr.mxu0 0.0
        %722 = vmatpush1.msra.mxu0 0.0
        %723 = vmatprep.subr.mxu0 0.0
        %724 = vmatpush1.msra.mxu0 0.0
        %725 = vmatprep.subr.mxu0 0.0
        %726 = vmatpush1.msra.mxu0 0.0
        %727 = vmatprep.subr.mxu0 0.0
        %728 = vmatpush1.msra.mxu0 0.0
        %729 = vmatprep.subr.mxu0 0.0
        %730 = vmatpush1.msra.mxu0 0.0
        %731 = vmatprep.subr.mxu0 0.0
        %732 = vmatpush1.msra.mxu0 0.0
        %733 = vmatprep.subr.mxu0 0.0
        %734 = vmatpush1.msra.mxu0 0.0
        %735 = vmatprep.subr.mxu0 0.0
        %736 = vmatpush1.msra.mxu0 0.0
        %737 = vmatprep.subr.mxu0 0.0
        %738 = vmatpush1.msra.mxu0 0.0
        %739 = vmatprep.subr.mxu0 0.0
        %740 = vmatpush1.msra.mxu0 0.0
        %741 = vmatprep.subr.mxu0 0.0
        %742 = vmatpush1.msra.mxu0 0.0
        %743 = vmatprep.subr.mxu0 0.0
        %744 = vmatpush1.msra.mxu0 0.0
        %745 = vmatprep.subr.mxu0 0.0
        %746 = vmatpush1.msra.mxu0 0.0
        %747 = vmatprep.subr.mxu0 0.0
        %748 = vmatpush1.msra.mxu0 0.0
        %749 = vmatprep.mubr.f32.mxu0 0.0
        %750 = vmatmul.mubr.f32.gmra.mrb[0].mxu0 %v683
        %v751 = vpop.f32.mrb[0].mxu0
        %v752 = vadd.f32 0.0, %v751
        %v753 = vpop.f32.mrb[0].mxu0
        %754 = vdwg.mxu0
        %v755 = vld [vmem:[%s2] sm:$0xff]
        %v756 = vld [vmem:[%s2 + $0x8] sm:$0xff]
        %v757 = vld [vmem:[%s2 + $0x10] sm:$0xff]
        %v758 = vld [vmem:[%s2 + $0x18] sm:$0xff]
        %759 = vmatprep.subr.mxu0 0.0
        %760 = vmatpush1.msra.mxu0 %v755
        %761 = vmatprep.subr.mxu0 0.0
        %762 = vmatpush1.msra.mxu0 %v756
        %763 = vmatprep.subr.mxu0 0.0
        %764 = vmatpush1.msra.mxu0 %v757
        %765 = vmatprep.subr.mxu0 0.0
        %766 = vmatpush1.msra.mxu0 %v758
        %767 = vmatprep.subr.mxu0 0.0
        %768 = vmatpush1.msra.mxu0 0.0
        %769 = vmatprep.subr.mxu0 0.0
        %770 = vmatpush1.msra.mxu0 0.0
        %771 = vmatprep.subr.mxu0 0.0
        %772 = vmatpush1.msra.mxu0 0.0
        %773 = vmatprep.subr.mxu0 0.0
        %774 = vmatpush1.msra.mxu0 0.0
        %775 = vmatprep.subr.mxu0 0.0
        %776 = vmatpush1.msra.mxu0 0.0
        %777 = vmatprep.subr.mxu0 0.0
        %778 = vmatpush1.msra.mxu0 0.0
        %779 = vmatprep.subr.mxu0 0.0
        %780 = vmatpush1.msra.mxu0 0.0
        %781 = vmatprep.subr.mxu0 0.0
        %782 = vmatpush1.msra.mxu0 0.0
        %783 = vmatprep.subr.mxu0 0.0
        %784 = vmatpush1.msra.mxu0 0.0
        %785 = vmatprep.subr.mxu0 0.0
        %786 = vmatpush1.msra.mxu0 0.0
        %787 = vmatprep.subr.mxu0 0.0
        %788 = vmatpush1.msra.mxu0 0.0
        %789 = vmatprep.subr.mxu0 0.0
        %790 = vmatpush1.msra.mxu0 0.0
        %791 = vmatprep.subr.mxu0 0.0
        %792 = vmatpush1.msra.mxu0 0.0
        %793 = vmatprep.subr.mxu0 0.0
        %794 = vmatpush1.msra.mxu0 0.0
        %795 = vmatprep.subr.mxu0 0.0
        %796 = vmatpush1.msra.mxu0 0.0
        %797 = vmatprep.subr.mxu0 0.0
        %798 = vmatpush1.msra.mxu0 0.0
        %799 = vmatprep.subr.mxu0 0.0
        %800 = vmatpush1.msra.mxu0 0.0
        %801 = vmatprep.subr.mxu0 0.0
        %802 = vmatpush1.msra.mxu0 0.0
        %803 = vmatprep.subr.mxu0 0.0
        %804 = vmatpush1.msra.mxu0 0.0
        %805 = vmatprep.subr.mxu0 0.0
        %806 = vmatpush1.msra.mxu0 0.0
        %807 = vmatprep.subr.mxu0 0.0
        %808 = vmatpush1.msra.mxu0 0.0
        %809 = vmatprep.subr.mxu0 0.0
        %810 = vmatpush1.msra.mxu0 0.0
        %811 = vmatprep.subr.mxu0 0.0
        %812 = vmatpush1.msra.mxu0 0.0
        %813 = vmatprep.subr.mxu0 0.0
        %814 = vmatpush1.msra.mxu0 0.0
        %815 = vmatprep.subr.mxu0 0.0
        %816 = vmatpush1.msra.mxu0 0.0
        %817 = vmatprep.subr.mxu0 0.0
        %818 = vmatpush1.msra.mxu0 0.0
        %819 = vmatprep.subr.mxu0 0.0
        %820 = vmatpush1.msra.mxu0 0.0
        %821 = vmatprep.subr.mxu0 0.0
        %822 = vmatpush1.msra.mxu0 0.0
        %823 = vmatprep.mubr.f32.mxu0 0.0
        %824 = vmatmul.mubr.f32.gmra.mrb[0].mxu0 %v683
        %v825 = vpop.f32.mrb[0].mxu0
        %v826 = vadd.f32 0.0, %v825
        %v827 = vpop.f32.mrb[0].mxu0
        %828 = vdwg.mxu0
        %v829 = vld [vmem:[%s3] sm:$0xff]
        %v830 = vld [vmem:[%s3 + $0x8] sm:$0xff]
        %v831 = vld [vmem:[%s3 + $0x10] sm:$0xff]
        %v832 = vld [vmem:[%s3 + $0x18] sm:$0xff]
        %833 = vmatprep.subr.mxu0 0.0
        %834 = vmatpush1.msra.mxu0 %v829
        %835 = vmatprep.subr.mxu0 0.0
        %836 = vmatpush1.msra.mxu0 %v830
        %837 = vmatprep.subr.mxu0 0.0
        %838 = vmatpush1.msra.mxu0 %v831
        %839 = vmatprep.subr.mxu0 0.0
        %840 = vmatpush1.msra.mxu0 %v832
        %841 = vmatprep.subr.mxu0 0.0
        %842 = vmatpush1.msra.mxu0 0.0
        %843 = vmatprep.subr.mxu0 0.0
        %844 = vmatpush1.msra.mxu0 0.0
        %845 = vmatprep.subr.mxu0 0.0
        %846 = vmatpush1.msra.mxu0 0.0
        %847 = vmatprep.subr.mxu0 0.0
        %848 = vmatpush1.msra.mxu0 0.0
        %849 = vmatprep.subr.mxu0 0.0
        %850 = vmatpush1.msra.mxu0 0.0
        %851 = vmatprep.subr.mxu0 0.0
        %852 = vmatpush1.msra.mxu0 0.0
        %853 = vmatprep.subr.mxu0 0.0
        %854 = vmatpush1.msra.mxu0 0.0
        %855 = vmatprep.subr.mxu0 0.0
        %856 = vmatpush1.msra.mxu0 0.0
        %857 = vmatprep.subr.mxu0 0.0
        %858 = vmatpush1.msra.mxu0 0.0
        %859 = vmatprep.subr.mxu0 0.0
        %860 = vmatpush1.msra.mxu0 0.0
        %861 = vmatprep.subr.mxu0 0.0
        %862 = vmatpush1.msra.mxu0 0.0
        %863 = vmatprep.subr.mxu0 0.0
        %864 = vmatpush1.msra.mxu0 0.0
        %865 = vmatprep.subr.mxu0 0.0
        %866 = vmatpush1.msra.mxu0 0.0
        %867 = vmatprep.subr.mxu0 0.0
        %868 = vmatpush1.msra.mxu0 0.0
        %869 = vmatprep.subr.mxu0 0.0
        %870 = vmatpush1.msra.mxu0 0.0
        %871 = vmatprep.subr.mxu0 0.0
        %872 = vmatpush1.msra.mxu0 0.0
        %873 = vmatprep.subr.mxu0 0.0
        %874 = vmatpush1.msra.mxu0 0.0
        %875 = vmatprep.subr.mxu0 0.0
        %876 = vmatpush1.msra.mxu0 0.0
        %877 = vmatprep.subr.mxu0 0.0
        %878 = vmatpush1.msra.mxu0 0.0
        %879 = vmatprep.subr.mxu0 0.0
        %880 = vmatpush1.msra.mxu0 0.0
        %881 = vmatprep.subr.mxu0 0.0
        %882 = vmatpush1.msra.mxu0 0.0
        %883 = vmatprep.subr.mxu0 0.0
        %884 = vmatpush1.msra.mxu0 0.0
        %885 = vmatprep.subr.mxu0 0.0
        %886 = vmatpush1.msra.mxu0 0.0
        %887 = vmatprep.subr.mxu0 0.0
        %888 = vmatpush1.msra.mxu0 0.0
        %889 = vmatprep.subr.mxu0 0.0
        %890 = vmatpush1.msra.mxu0 0.0
        %891 = vmatprep.subr.mxu0 0.0
        %892 = vmatpush1.msra.mxu0 0.0
        %893 = vmatprep.subr.mxu0 0.0
        %894 = vmatpush1.msra.mxu0 0.0
        %895 = vmatprep.subr.mxu0 0.0
        %896 = vmatpush1.msra.mxu0 0.0
        %897 = vmatprep.mubr.f32.mxu0 0.0
        %898 = vmatmul.mubr.f32.gmra.mrb[0].mxu0 %v683
        %v899 = vpop.f32.mrb[0].mxu0
        %v900 = vadd.f32 0.0, %v899
        %v901 = vpop.f32.mrb[0].mxu0
        %902 = vdwg.mxu0
        %v904 = vsel %vm681, %v752, 0
        %v907 = vsel %vm681, %v826, 0
        %909 = vmatprep.subr.mxu0 0.0
        %910 = vmatpush1.xpose.msra.mxu0 %v907
        %911 = vmatprep.subr.mxu0 0.0
        %912 = vmatpush1.xpose.msra.mxu0 0.0
        %913 = vmatprep.subr.mxu0 0.0
        %914 = vmatpush1.xpose.msra.mxu0 0.0
        %915 = vmatprep.subr.mxu0 0.0
        %916 = vmatpush1.xpose.msra.mxu0 0.0
        %917 = vmatprep.subr.mxu0 0.0
        %918 = vmatpush1.xpose.msra.mxu0 0.0
        %919 = vmatprep.subr.mxu0 0.0
        %920 = vmatpush1.xpose.msra.mxu0 0.0
        %921 = vmatprep.subr.mxu0 0.0
        %922 = vmatpush1.xpose.msra.mxu0 0.0
        %923 = vmatprep.subr.mxu0 0.0
        %924 = vmatpush1.xpose.msra.mxu0 0.0
        %925 = vmatprep.subr.mxu0 0.0
        %926 = vmatpush1.xpose.msra.mxu0 0.0
        %927 = vmatprep.subr.mxu0 0.0
        %928 = vmatpush1.xpose.msra.mxu0 0.0
        %929 = vmatprep.subr.mxu0 0.0
        %930 = vmatpush1.xpose.msra.mxu0 0.0
        %931 = vmatprep.subr.mxu0 0.0
        %932 = vmatpush1.xpose.msra.mxu0 0.0
        %933 = vmatprep.subr.mxu0 0.0
        %934 = vmatpush1.xpose.msra.mxu0 0.0
        %935 = vmatprep.subr.mxu0 0.0
        %936 = vmatpush1.xpose.msra.mxu0 0.0
        %937 = vmatprep.subr.mxu0 0.0
        %938 = vmatpush1.xpose.msra.mxu0 0.0
        %939 = vmatprep.subr.mxu0 0.0
        %940 = vmatpush1.xpose.msra.mxu0 0.0
        %941 = vmatprep.subr.mxu0 0.0
        %942 = vmatpush1.xpose.msra.mxu0 0.0
        %943 = vmatprep.subr.mxu0 0.0
        %944 = vmatpush1.xpose.msra.mxu0 0.0
        %945 = vmatprep.subr.mxu0 0.0
        %946 = vmatpush1.xpose.msra.mxu0 0.0
        %947 = vmatprep.subr.mxu0 0.0
        %948 = vmatpush1.xpose.msra.mxu0 0.0
        %949 = vmatprep.subr.mxu0 0.0
        %950 = vmatpush1.xpose.msra.mxu0 0.0
        %951 = vmatprep.subr.mxu0 0.0
        %952 = vmatpush1.xpose.msra.mxu0 0.0
        %953 = vmatprep.subr.mxu0 0.0
        %954 = vmatpush1.xpose.msra.mxu0 0.0
        %955 = vmatprep.subr.mxu0 0.0
        %956 = vmatpush1.xpose.msra.mxu0 0.0
        %957 = vmatprep.subr.mxu0 0.0
        %958 = vmatpush1.xpose.msra.mxu0 0.0
        %959 = vmatprep.subr.mxu0 0.0
        %960 = vmatpush1.xpose.msra.mxu0 0.0
        %961 = vmatprep.subr.mxu0 0.0
        %962 = vmatpush1.xpose.msra.mxu0 0.0
        %963 = vmatprep.subr.mxu0 0.0
        %964 = vmatpush1.xpose.msra.mxu0 0.0
        %965 = vmatprep.subr.mxu0 0.0
        %966 = vmatpush1.xpose.msra.mxu0 0.0
        %967 = vmatprep.subr.mxu0 0.0
        %968 = vmatpush1.xpose.msra.mxu0 0.0
        %969 = vmatprep.subr.mxu0 0.0
        %970 = vmatpush1.xpose.msra.mxu0 0.0
        %971 = vmatprep.subr.mxu0 0.0
        %972 = vmatpush1.xpose.msra.mxu0 0.0
        %973 = vmatprep.mubr.f32.mxu0 0.0
        %974 = vmatmul.mubr.f32.gmra.mrb[0].mxu0 %v904
        %v975 = vpop.f32.mrb[0].mxu0
        %v976 = vadd.f32 0.0, %v975
        %v977 = vpop.f32.mrb[0].mxu0
        %978 = vdwg.mxu0
        %vm979 = vcmask 64512
        %v980 = vsel %vm979, %v976, -inf
        %981 = vmax.xlane.f32.xlu0 %v980
        %v982 = vpop.xlane.xlu0 %981
        %v983 = vsub.f32 %v976, %v982
        %v984 = vmul.f32 %v983, 1.442695
        %v985 = vpow.pop %v984
        %v986 = vsel %vm979, %v985, 0.0
        %987 = vadd.xlane.f32.xlu0 %v986
        %v988 = vpop.xlane.xlu0 %987
        %v989 = vrcp.pop %v988
        %v990 = vmul.f32 %v985, %v989
        %v992 = vsel %vm979, %v990, 0
        %994 = vmatprep.subr.mxu0 0.0
        %995 = vmatpush1.msra.mxu0 %v900
        %996 = vmatprep.subr.mxu0 0.0
        %997 = vmatpush1.msra.mxu0 0.0
        %998 = vmatprep.subr.mxu0 0.0
        %999 = vmatpush1.msra.mxu0 0.0
        %1000 = vmatprep.subr.mxu0 0.0
        %1001 = vmatpush1.msra.mxu0 0.0
        %1002 = vmatprep.subr.mxu0 0.0
        %1003 = vmatpush1.msra.mxu0 0.0
        %1004 = vmatprep.subr.mxu0 0.0
        %1005 = vmatpush1.msra.mxu0 0.0
        %1006 = vmatprep.subr.mxu0 0.0
        %1007 = vmatpush1.msra.mxu0 0.0
        %1008 = vmatprep.subr.mxu0 0.0
        %1009 = vmatpush1.msra.mxu0 0.0
        %1010 = vmatprep.subr.mxu0 0.0
        %1011 = vmatpush1.msra.mxu0 0.0
        %1012 = vmatprep.subr.mxu0 0.0
        %1013 = vmatpush1.msra.mxu0 0.0
        %1014 = vmatprep.subr.mxu0 0.0
        %1015 = vmatpush1.msra.mxu0 0.0
        %1016 = vmatprep.subr.mxu0 0.0
        %1017 = vmatpush1.msra.mxu0 0.0
        %1018 = vmatprep.subr.mxu0 0.0
        %1019 = vmatpush1.msra.mxu0 0.0
        %1020 = vmatprep.subr.mxu0 0.0
        %1021 = vmatpush1.msra.mxu0 0.0
        %1022 = vmatprep.subr.mxu0 0.0
        %1023 = vmatpush1.msra.mxu0 0.0
        %1024 = vmatprep.subr.mxu0 0.0
        %1025 = vmatpush1.msra.mxu0 0.0
        %1026 = vmatprep.subr.mxu0 0.0
        %1027 = vmatpush1.msra.mxu0 0.0
        %1028 = vmatprep.subr.mxu0 0.0
        %1029 = vmatpush1.msra.mxu0 0.0
        %1030 = vmatprep.subr.mxu0 0.0
        %1031 = vmatpush1.msra.mxu0 0.0
        %1032 = vmatprep.subr.mxu0 0.0
        %1033 = vmatpush1.msra.mxu0 0.0
        %1034 = vmatprep.subr.mxu0 0.0
        %1035 = vmatpush1.msra.mxu0 0.0
        %1036 = vmatprep.subr.mxu0 0.0
        %1037 = vmatpush1.msra.mxu0 0.0
        %1038 = vmatprep.subr.mxu0 0.0
        %1039 = vmatpush1.msra.mxu0 0.0
        %1040 = vmatprep.subr.mxu0 0.0
        %1041 = vmatpush1.msra.mxu0 0.0
        %1042 = vmatprep.subr.mxu0 0.0
        %1043 = vmatpush1.msra.mxu0 0.0
        %1044 = vmatprep.subr.mxu0 0.0
        %1045 = vmatpush1.msra.mxu0 0.0
        %1046 = vmatprep.subr.mxu0 0.0
        %1047 = vmatpush1.msra.mxu0 0.0
        %1048 = vmatprep.subr.mxu0 0.0
        %1049 = vmatpush1.msra.mxu0 0.0
        %1050 = vmatprep.subr.mxu0 0.0
        %1051 = vmatpush1.msra.mxu0 0.0
        %1052 = vmatprep.subr.mxu0 0.0
        %1053 = vmatpush1.msra.mxu0 0.0
        %1054 = vmatprep.subr.mxu0 0.0
        %1055 = vmatpush1.msra.mxu0 0.0
        %1056 = vmatprep.subr.mxu0 0.0
        %1057 = vmatpush1.msra.mxu0 0.0
        %1058 = vmatprep.mubr.f32.mxu0 0.0
        %1059 = vmatmul.mubr.f32.gmra.mrb[0].mxu0 %v992
        %v1060 = vpop.f32.mrb[0].mxu0
        %v1061 = vadd.f32 0.0, %v1060
        %v1062 = vpop.f32.mrb[0].mxu0
        %1063 = vdwg.mxu0
        %v1064 = vld [vmem:[%s4] sm:$0xff]
        %v1065 = vld [vmem:[%s4 + $0x8] sm:$0xff]
        %v1066 = vld [vmem:[%s4 + $0x10] sm:$0xff]
        %v1067 = vld [vmem:[%s4 + $0x18] sm:$0xff]
        %1068 = vmatprep.subr.mxu0 0.0
        %1069 = vmatpush1.msra.mxu0 %v1064
        %1070 = vmatprep.subr.mxu0 0.0
        %1071 = vmatpush1.msra.mxu0 %v1065
        %1072 = vmatprep.subr.mxu0 0.0
        %1073 = vmatpush1.msra.mxu0 %v1066
        %1074 = vmatprep.subr.mxu0 0.0
        %1075 = vmatpush1.msra.mxu0 %v1067
        %1076 = vmatprep.subr.mxu0 0.0
        %1077 = vmatpush1.msra.mxu0 0.0
        %1078 = vmatprep.subr.mxu0 0.0
        %1079 = vmatpush1.msra.mxu0 0.0
        %1080 = vmatprep.subr.mxu0 0.0
        %1081 = vmatpush1.msra.mxu0 0.0
        %1082 = vmatprep.subr.mxu0 0.0
        %1083 = vmatpush1.msra.mxu0 0.0
        %1084 = vmatprep.subr.mxu0 0.0
        %1085 = vmatpush1.msra.mxu0 0.0
        %1086 = vmatprep.subr.mxu0 0.0
        %1087 = vmatpush1.msra.mxu0 0.0
        %1088 = vmatprep.subr.mxu0 0.0
        %1089 = vmatpush1.msra.mxu0 0.0
        %1090 = vmatprep.subr.mxu0 0.0
        %1091 = vmatpush1.msra.mxu0 0.0
        %1092 = vmatprep.subr.mxu0 0.0
        %1093 = vmatpush1.msra.mxu0 0.0
        %1094 = vmatprep.subr.mxu0 0.0
        %1095 = vmatpush1.msra.mxu0 0.0
        %1096 = vmatprep.subr.mxu0 0.0
        %1097 = vmatpush1.msra.mxu0 0.0
        %1098 = vmatprep.subr.mxu0 0.0
        %1099 = vmatpush1.msra.mxu0 0.0
        %1100 = vmatprep.subr.mxu0 0.0
        %1101 = vmatpush1.msra.mxu0 0.0
        %1102 = vmatprep.subr.mxu0 0.0
        %1103 = vmatpush1.msra.mxu0 0.0
        %1104 = vmatprep.subr.mxu0 0.0
        %1105 = vmatpush1.msra.mxu0 0.0
        %1106 = vmatprep.subr.mxu0 0.0
        %1107 = vmatpush1.msra.mxu0 0.0
        %1108 = vmatprep.subr.mxu0 0.0
        %1109 = vmatpush1.msra.mxu0 0.0
        %1110 = vmatprep.subr.mxu0 0.0
        %1111 = vmatpush1.msra.mxu0 0.0
        %1112 = vmatprep.subr.mxu0 0.0
        %1113 = vmatpush1.msra.mxu0 0.0
        %1114 = vmatprep.subr.mxu0 0.0
        %1115 = vmatpush1.msra.mxu0 0.0
        %1116 = vmatprep.subr.mxu0 0.0
        %1117 = vmatpush1.msra.mxu0 0.0
        %1118 = vmatprep.subr.mxu0 0.0
        %1119 = vmatpush1.msra.mxu0 0.0
        %1120 = vmatprep.subr.mxu0 0.0
        %1121 = vmatpush1.msra.mxu0 0.0
        %1122 = vmatprep.subr.mxu0 0.0
        %1123 = vmatpush1.msra.mxu0 0.0
        %1124 = vmatprep.subr.mxu0 0.0
        %1125 = vmatpush1.msra.mxu0 0.0
        %1126 = vmatprep.subr.mxu0 0.0
        %1127 = vmatpush1.msra.mxu0 0.0
        %1128 = vmatprep.subr.mxu0 0.0
        %1129 = vmatpush1.msra.mxu0 0.0
        %1130 = vmatprep.subr.mxu0 0.0
        %1131 = vmatpush1.msra.mxu0 0.0
        %1132 = vmatprep.mubr.f32.mxu0 0.0
        %1133 = vmatmul.mubr.f32.gmra.mrb[0].mxu0 %v683
        %v1134 = vpop.f32.mrb[0].mxu0
        %v1135 = vadd.f32 0.0, %v1134
        %v1136 = vpop.f32.mrb[0].mxu0
        %1137 = vdwg.mxu0
        %v1138 = vld [vmem:[#allocation4] sm:$0xff]
        %v1139 = vld [vmem:[#allocation4 + $0x8] sm:$0xff]
        %v1140 = vld [vmem:[#allocation4 + $0x10] sm:$0xff]
        %v1141 = vld [vmem:[#allocation4 + $0x18] sm:$0xff]
        %1142 = vmatprep.subr.mxu0 0.0
        %1143 = vmatpush1.msra.mxu0 %v1138
        %1144 = vmatprep.subr.mxu0 0.0
        %1145 = vmatpush1.msra.mxu0 %v1139
        %1146 = vmatprep.subr.mxu0 0.0
        %1147 = vmatpush1.msra.mxu0 %v1140
        %1148 = vmatprep.subr.mxu0 0.0
        %1149 = vmatpush1.msra.mxu0 %v1141
        %1150 = vmatprep.subr.mxu0 0.0
        %1151 = vmatpush1.msra.mxu0 0.0
        %1152 = vmatprep.subr.mxu0 0.0
        %1153 = vmatpush1.msra.mxu0 0.0
        %1154 = vmatprep.subr.mxu0 0.0
        %1155 = vmatpush1.msra.mxu0 0.0
        %1156 = vmatprep.subr.mxu0 0.0
        %1157 = vmatpush1.msra.mxu0 0.0
        %1158 = vmatprep.subr.mxu0 0.0
        %1159 = vmatpush1.msra.mxu0 0.0
        %1160 = vmatprep.subr.mxu0 0.0
        %1161 = vmatpush1.msra.mxu0 0.0
        %1162 = vmatprep.subr.mxu0 0.0
        %1163 = vmatpush1.msra.mxu0 0.0
        %1164 = vmatprep.subr.mxu0 0.0
        %1165 = vmatpush1.msra.mxu0 0.0
        %1166 = vmatprep.subr.mxu0 0.0
        %1167 = vmatpush1.msra.mxu0 0.0
        %1168 = vmatprep.subr.mxu0 0.0
        %1169 = vmatpush1.msra.mxu0 0.0
        %1170 = vmatprep.subr.mxu0 0.0
        %1171 = vmatpush1.msra.mxu0 0.0
        %1172 = vmatprep.subr.mxu0 0.0
        %1173 = vmatpush1.msra.mxu0 0.0
        %1174 = vmatprep.subr.mxu0 0.0
        %1175 = vmatpush1.msra.mxu0 0.0
        %1176 = vmatprep.subr.mxu0 0.0
        %1177 = vmatpush1.msra.mxu0 0.0
        %1178 = vmatprep.subr.mxu0 0.0
        %1179 = vmatpush1.msra.mxu0 0.0
        %1180 = vmatprep.subr.mxu0 0.0
        %1181 = vmatpush1.msra.mxu0 0.0
        %1182 = vmatprep.subr.mxu0 0.0
        %1183 = vmatpush1.msra.mxu0 0.0
        %1184 = vmatprep.subr.mxu0 0.0
        %1185 = vmatpush1.msra.mxu0 0.0
        %1186 = vmatprep.subr.mxu0 0.0
        %1187 = vmatpush1.msra.mxu0 0.0
        %1188 = vmatprep.subr.mxu0 0.0
        %1189 = vmatpush1.msra.mxu0 0.0
        %1190 = vmatprep.subr.mxu0 0.0
        %1191 = vmatpush1.msra.mxu0 0.0
        %1192 = vmatprep.subr.mxu0 0.0
        %1193 = vmatpush1.msra.mxu0 0.0
        %1194 = vmatprep.subr.mxu0 0.0
        %1195 = vmatpush1.msra.mxu0 0.0
        %1196 = vmatprep.subr.mxu0 0.0
        %1197 = vmatpush1.msra.mxu0 0.0
        %1198 = vmatprep.subr.mxu0 0.0
        %1199 = vmatpush1.msra.mxu0 0.0
        %1200 = vmatprep.subr.mxu0 0.0
        %1201 = vmatpush1.msra.mxu0 0.0
        %1202 = vmatprep.subr.mxu0 0.0
        %1203 = vmatpush1.msra.mxu0 0.0
        %1204 = vmatprep.subr.mxu0 0.0
        %1205 = vmatpush1.msra.mxu0 0.0
        %1206 = vmatprep.mubr.f32.mxu0 0.0
        %1207 = vmatmul.mubr.f32.gmra.mrb[0].mxu0 %v683
        %v1208 = vpop.f32.mrb[0].mxu0
        %v1209 = vadd.f32 0.0, %v1208
        %v1210 = vpop.f32.mrb[0].mxu0
        %1211 = vdwg.mxu0
        %v1212 = vld [vmem:[#allocation6] sm:$0xff]
        %v1213 = vld [vmem:[#allocation6 + $0x8] sm:$0xff]
        %v1214 = vld [vmem:[#allocation6 + $0x10] sm:$0xff]
        %v1215 = vld [vmem:[#allocation6 + $0x18] sm:$0xff]
        %1216 = vmatprep.subr.mxu0 0.0
        %1217 = vmatpush1.msra.mxu0 %v1212
        %1218 = vmatprep.subr.mxu0 0.0
        %1219 = vmatpush1.msra.mxu0 %v1213
        %1220 = vmatprep.subr.mxu0 0.0
        %1221 = vmatpush1.msra.mxu0 %v1214
        %1222 = vmatprep.subr.mxu0 0.0
        %1223 = vmatpush1.msra.mxu0 %v1215
        %1224 = vmatprep.subr.mxu0 0.0
        %1225 = vmatpush1.msra.mxu0 0.0
        %1226 = vmatprep.subr.mxu0 0.0
        %1227 = vmatpush1.msra.mxu0 0.0
        %1228 = vmatprep.subr.mxu0 0.0
        %1229 = vmatpush1.msra.mxu0 0.0
        %1230 = vmatprep.subr.mxu0 0.0
        %1231 = vmatpush1.msra.mxu0 0.0
        %1232 = vmatprep.subr.mxu0 0.0
        %1233 = vmatpush1.msra.mxu0 0.0
        %1234 = vmatprep.subr.mxu0 0.0
        %1235 = vmatpush1.msra.mxu0 0.0
        %1236 = vmatprep.subr.mxu0 0.0
        %1237 = vmatpush1.msra.mxu0 0.0
        %1238 = vmatprep.subr.mxu0 0.0
        %1239 = vmatpush1.msra.mxu0 0.0
        %1240 = vmatprep.subr.mxu0 0.0
        %1241 = vmatpush1.msra.mxu0 0.0
        %1242 = vmatprep.subr.mxu0 0.0
        %1243 = vmatpush1.msra.mxu0 0.0
        %1244 = vmatprep.subr.mxu0 0.0
        %1245 = vmatpush1.msra.mxu0 0.0
        %1246 = vmatprep.subr.mxu0 0.0
        %1247 = vmatpush1.msra.mxu0 0.0
        %1248 = vmatprep.subr.mxu0 0.0
        %1249 = vmatpush1.msra.mxu0 0.0
        %1250 = vmatprep.subr.mxu0 0.0
        %1251 = vmatpush1.msra.mxu0 0.0
        %1252 = vmatprep.subr.mxu0 0.0
        %1253 = vmatpush1.msra.mxu0 0.0
        %1254 = vmatprep.subr.mxu0 0.0
        %1255 = vmatpush1.msra.mxu0 0.0
        %1256 = vmatprep.subr.mxu0 0.0
        %1257 = vmatpush1.msra.mxu0 0.0
        %1258 = vmatprep.subr.mxu0 0.0
        %1259 = vmatpush1.msra.mxu0 0.0
        %1260 = vmatprep.subr.mxu0 0.0
        %1261 = vmatpush1.msra.mxu0 0.0
        %1262 = vmatprep.subr.mxu0 0.0
        %1263 = vmatpush1.msra.mxu0 0.0
        %1264 = vmatprep.subr.mxu0 0.0
        %1265 = vmatpush1.msra.mxu0 0.0
        %1266 = vmatprep.subr.mxu0 0.0
        %1267 = vmatpush1.msra.mxu0 0.0
        %1268 = vmatprep.subr.mxu0 0.0
        %1269 = vmatpush1.msra.mxu0 0.0
        %1270 = vmatprep.subr.mxu0 0.0
        %1271 = vmatpush1.msra.mxu0 0.0
        %1272 = vmatprep.subr.mxu0 0.0
        %1273 = vmatpush1.msra.mxu0 0.0
        %1274 = vmatprep.subr.mxu0 0.0
        %1275 = vmatpush1.msra.mxu0 0.0
        %1276 = vmatprep.subr.mxu0 0.0
        %1277 = vmatpush1.msra.mxu0 0.0
        %1278 = vmatprep.subr.mxu0 0.0
        %1279 = vmatpush1.msra.mxu0 0.0
        %1280 = vmatprep.mubr.f32.mxu0 0.0
        %1281 = vmatmul.mubr.f32.gmra.mrb[0].mxu0 %v683
        %v1282 = vpop.f32.mrb[0].mxu0
        %v1283 = vadd.f32 0.0, %v1282
        %v1284 = vpop.f32.mrb[0].mxu0
        %1285 = vdwg.mxu0
        %v1286 = vld [vmem:[%s9] sm:$0xff]
        %v1287 = vld [vmem:[%s9 + $0x8] sm:$0xff]
        %v1289 = vsel %vm979, %v1286, 0
        %v1292 = vsel %vm979, %v1287, 0
        %1294 = vmatprep.subr.mxu0 0.0
        %1295 = vmatpush1.msra.mxu0 %v1135
        %1296 = vmatprep.subr.mxu0 0.0
        %1297 = vmatpush1.msra.mxu0 0.0
        %1298 = vmatprep.subr.mxu0 0.0
        %1299 = vmatpush1.msra.mxu0 0.0
        %1300 = vmatprep.subr.mxu0 0.0
        %1301 = vmatpush1.msra.mxu0 0.0
        %1302 = vmatprep.subr.mxu0 0.0
        %1303 = vmatpush1.msra.mxu0 0.0
        %1304 = vmatprep.subr.mxu0 0.0
        %1305 = vmatpush1.msra.mxu0 0.0
        %1306 = vmatprep.subr.mxu0 0.0
        %1307 = vmatpush1.msra.mxu0 0.0
        %1308 = vmatprep.subr.mxu0 0.0
        %1309 = vmatpush1.msra.mxu0 0.0
        %1310 = vmatprep.subr.mxu0 0.0
        %1311 = vmatpush1.msra.mxu0 0.0
        %1312 = vmatprep.subr.mxu0 0.0
        %1313 = vmatpush1.msra.mxu0 0.0
        %1314 = vmatprep.subr.mxu0 0.0
        %1315 = vmatpush1.msra.mxu0 0.0
        %1316 = vmatprep.subr.mxu0 0.0
        %1317 = vmatpush1.msra.mxu0 0.0
        %1318 = vmatprep.subr.mxu0 0.0
        %1319 = vmatpush1.msra.mxu0 0.0
        %1320 = vmatprep.subr.mxu0 0.0
        %1321 = vmatpush1.msra.mxu0 0.0
        %1322 = vmatprep.subr.mxu0 0.0
        %1323 = vmatpush1.msra.mxu0 0.0
        %1324 = vmatprep.subr.mxu0 0.0
        %1325 = vmatpush1.msra.mxu0 0.0
        %1326 = vmatprep.subr.mxu0 0.0
        %1327 = vmatpush1.msra.mxu0 0.0
        %1328 = vmatprep.subr.mxu0 0.0
        %1329 = vmatpush1.msra.mxu0 0.0
        %1330 = vmatprep.subr.mxu0 0.0
        %1331 = vmatpush1.msra.mxu0 0.0
        %1332 = vmatprep.subr.mxu0 0.0
        %1333 = vmatpush1.msra.mxu0 0.0
        %1334 = vmatprep.subr.mxu0 0.0
        %1335 = vmatpush1.msra.mxu0 0.0
        %1336 = vmatprep.subr.mxu0 0.0
        %1337 = vmatpush1.msra.mxu0 0.0
        %1338 = vmatprep.subr.mxu0 0.0
        %1339 = vmatpush1.msra.mxu0 0.0
        %1340 = vmatprep.subr.mxu0 0.0
        %1341 = vmatpush1.msra.mxu0 0.0
        %1342 = vmatprep.subr.mxu0 0.0
        %1343 = vmatpush1.msra.mxu0 0.0
        %1344 = vmatprep.subr.mxu0 0.0
        %1345 = vmatpush1.msra.mxu0 0.0
        %1346 = vmatprep.subr.mxu0 0.0
        %1347 = vmatpush1.msra.mxu0 0.0
        %1348 = vmatprep.subr.mxu0 0.0
        %1349 = vmatpush1.msra.mxu0 0.0
        %1350 = vmatprep.subr.mxu0 0.0
        %1351 = vmatpush1.msra.mxu0 0.0
        %1352 = vmatprep.subr.mxu0 0.0
        %1353 = vmatpush1.msra.mxu0 0.0
        %1354 = vmatprep.subr.mxu0 0.0
        %1355 = vmatpush1.msra.mxu0 0.0
        %1356 = vmatprep.subr.mxu0 0.0
        %1357 = vmatpush1.msra.mxu0 0.0
        %1358 = vmatprep.mubr.f32.mxu0 0.0
        %1359 = vmatmul.mubr.f32.gmra.mrb[0].mxu0 %v1289
        %v1360 = vpop.f32.mrb[0].mxu0
        %v1361 = vadd.f32 0.0, %v1360
        %v1362 = vpop.f32.mrb[0].mxu0
        %1363 = vmatprep.mubr.f32.mxu0 0.0
        %1364 = vmatmul.mubr.f32.gmra.mrb[0].mxu0 %v1292
        %v1365 = vpop.f32.mrb[0].mxu0
        %v1366 = vadd.f32 0.0, %v1365
        %v1367 = vpop.f32.mrb[0].mxu0
        %1368 = vdwg.mxu0
        %1369 = vmatprep.subr.mxu0 0.0
        %1370 = vmatpush1.msra.mxu0 %v1209
        %1371 = vmatprep.subr.mxu0 0.0
        %1372 = vmatpush1.msra.mxu0 0.0
        %1373 = vmatprep.subr.mxu0 0.0
        %1374 = vmatpush1.msra.mxu0 0.0
        %1375 = vmatprep.subr.mxu0 0.0
        %1376 = vmatpush1.msra.mxu0 0.0
        %1377 = vmatprep.subr.mxu0 0.0
        %1378 = vmatpush1.msra.mxu0 0.0
        %1379 = vmatprep.subr.mxu0 0.0
        %1380 = vmatpush1.msra.mxu0 0.0
        %1381 = vmatprep.subr.mxu0 0.0
        %1382 = vmatpush1.msra.mxu0 0.0
        %1383 = vmatprep.subr.mxu0 0.0
        %1384 = vmatpush1.msra.mxu0 0.0
        %1385 = vmatprep.subr.mxu0 0.0
        %1386 = vmatpush1.msra.mxu0 0.0
        %1387 = vmatprep.subr.mxu0 0.0
        %1388 = vmatpush1.msra.mxu0 0.0
        %1389 = vmatprep.subr.mxu0 0.0
        %1390 = vmatpush1.msra.mxu0 0.0
        %1391 = vmatprep.subr.mxu0 0.0
        %1392 = vmatpush1.msra.mxu0 0.0
        %1393 = vmatprep.subr.mxu0 0.0
        %1394 = vmatpush1.msra.mxu0 0.0
        %1395 = vmatprep.subr.mxu0 0.0
        %1396 = vmatpush1.msra.mxu0 0.0
        %1397 = vmatprep.subr.mxu0 0.0
        %1398 = vmatpush1.msra.mxu0 0.0
        %1399 = vmatprep.subr.mxu0 0.0
        %1400 = vmatpush1.msra.mxu0 0.0
        %1401 = vmatprep.subr.mxu0 0.0
        %1402 = vmatpush1.msra.mxu0 0.0
        %1403 = vmatprep.subr.mxu0 0.0
        %1404 = vmatpush1.msra.mxu0 0.0
        %1405 = vmatprep.subr.mxu0 0.0
        %1406 = vmatpush1.msra.mxu0 0.0
        %1407 = vmatprep.subr.mxu0 0.0
        %1408 = vmatpush1.msra.mxu0 0.0
        %1409 = vmatprep.subr.mxu0 0.0
        %1410 = vmatpush1.msra.mxu0 0.0
        %1411 = vmatprep.subr.mxu0 0.0
        %1412 = vmatpush1.msra.mxu0 0.0
        %1413 = vmatprep.subr.mxu0 0.0
        %1414 = vmatpush1.msra.mxu0 0.0
        %1415 = vmatprep.subr.mxu0 0.0
        %1416 = vmatpush1.msra.mxu0 0.0
        %1417 = vmatprep.subr.mxu0 0.0
        %1418 = vmatpush1.msra.mxu0 0.0
        %1419 = vmatprep.subr.mxu0 0.0
        %1420 = vmatpush1.msra.mxu0 0.0
        %1421 = vmatprep.subr.mxu0 0.0
        %1422 = vmatpush1.msra.mxu0 0.0
        %1423 = vmatprep.subr.mxu0 0.0
        %1424 = vmatpush1.msra.mxu0 0.0
        %1425 = vmatprep.subr.mxu0 0.0
        %1426 = vmatpush1.msra.mxu0 0.0
        %1427 = vmatprep.subr.mxu0 0.0
        %1428 = vmatpush1.msra.mxu0 0.0
        %1429 = vmatprep.subr.mxu0 0.0
        %1430 = vmatpush1.msra.mxu0 0.0
        %1431 = vmatprep.subr.mxu0 0.0
        %1432 = vmatpush1.msra.mxu0 0.0
        %1433 = vmatprep.mubr.f32.mxu0 0.0
        %1434 = vmatmul.mubr.f32.gmra.mrb[0].mxu0 %v1289
        %v1435 = vpop.f32.mrb[0].mxu0
        %v1436 = vadd.f32 0.0, %v1435
        %v1437 = vpop.f32.mrb[0].mxu0
        %1438 = vmatprep.mubr.f32.mxu0 0.0
        %1439 = vmatmul.mubr.f32.gmra.mrb[0].mxu0 %v1292
        %v1440 = vpop.f32.mrb[0].mxu0
        %v1441 = vadd.f32 0.0, %v1440
        %v1442 = vpop.f32.mrb[0].mxu0
        %1443 = vdwg.mxu0
        %1444 = vmatprep.subr.mxu0 0.0
        %1445 = vmatpush1.msra.mxu0 %v1283
        %1446 = vmatprep.subr.mxu0 0.0
        %1447 = vmatpush1.msra.mxu0 0.0
        %1448 = vmatprep.subr.mxu0 0.0
        %1449 = vmatpush1.msra.mxu0 0.0
        %1450 = vmatprep.subr.mxu0 0.0
        %1451 = vmatpush1.msra.mxu0 0.0
        %1452 = vmatprep.subr.mxu0 0.0
        %1453 = vmatpush1.msra.mxu0 0.0
        %1454 = vmatprep.subr.mxu0 0.0
        %1455 = vmatpush1.msra.mxu0 0.0
        %1456 = vmatprep.subr.mxu0 0.0
        %1457 = vmatpush1.msra.mxu0 0.0
        %1458 = vmatprep.subr.mxu0 0.0
        %1459 = vmatpush1.msra.mxu0 0.0
        %1460 = vmatprep.subr.mxu0 0.0
        %1461 = vmatpush1.msra.mxu0 0.0
        %1462 = vmatprep.subr.mxu0 0.0
        %1463 = vmatpush1.msra.mxu0 0.0
        %1464 = vmatprep.subr.mxu0 0.0
        %1465 = vmatpush1.msra.mxu0 0.0
        %1466 = vmatprep.subr.mxu0 0.0
        %1467 = vmatpush1.msra.mxu0 0.0
        %1468 = vmatprep.subr.mxu0 0.0
        %1469 = vmatpush1.msra.mxu0 0.0
        %1470 = vmatprep.subr.mxu0 0.0
        %1471 = vmatpush1.msra.mxu0 0.0
        %1472 = vmatprep.subr.mxu0 0.0
        %1473 = vmatpush1.msra.mxu0 0.0
        %1474 = vmatprep.subr.mxu0 0.0
        %1475 = vmatpush1.msra.mxu0 0.0
        %1476 = vmatprep.subr.mxu0 0.0
        %1477 = vmatpush1.msra.mxu0 0.0
        %1478 = vmatprep.subr.mxu0 0.0
        %1479 = vmatpush1.msra.mxu0 0.0
        %1480 = vmatprep.subr.mxu0 0.0
        %1481 = vmatpush1.msra.mxu0 0.0
        %1482 = vmatprep.subr.mxu0 0.0
        %1483 = vmatpush1.msra.mxu0 0.0
        %1484 = vmatprep.subr.mxu0 0.0
        %1485 = vmatpush1.msra.mxu0 0.0
        %1486 = vmatprep.subr.mxu0 0.0
        %1487 = vmatpush1.msra.mxu0 0.0
        %1488 = vmatprep.subr.mxu0 0.0
        %1489 = vmatpush1.msra.mxu0 0.0
        %1490 = vmatprep.subr.mxu0 0.0
        %1491 = vmatpush1.msra.mxu0 0.0
        %1492 = vmatprep.subr.mxu0 0.0
        %1493 = vmatpush1.msra.mxu0 0.0
        %1494 = vmatprep.subr.mxu0 0.0
        %1495 = vmatpush1.msra.mxu0 0.0
        %1496 = vmatprep.subr.mxu0 0.0
        %1497 = vmatpush1.msra.mxu0 0.0
        %1498 = vmatprep.subr.mxu0 0.0
        %1499 = vmatpush1.msra.mxu0 0.0
        %1500 = vmatprep.subr.mxu0 0.0
        %1501 = vmatpush1.msra.mxu0 0.0
        %1502 = vmatprep.subr.mxu0 0.0
        %1503 = vmatpush1.msra.mxu0 0.0
        %1504 = vmatprep.subr.mxu0 0.0
        %1505 = vmatpush1.msra.mxu0 0.0
        %1506 = vmatprep.subr.mxu0 0.0
        %1507 = vmatpush1.msra.mxu0 0.0
        %1508 = vmatprep.mubr.f32.mxu0 0.0
        %1509 = vmatmul.mubr.f32.gmra.mrb[0].mxu0 %v1289
        %v1510 = vpop.f32.mrb[0].mxu0
        %v1511 = vadd.f32 0.0, %v1510
        %v1512 = vpop.f32.mrb[0].mxu0
        %1513 = vmatprep.mubr.f32.mxu0 0.0
        %1514 = vmatmul.mubr.f32.gmra.mrb[0].mxu0 %v1292
        %v1515 = vpop.f32.mrb[0].mxu0
        %v1516 = vadd.f32 0.0, %v1515
        %v1517 = vpop.f32.mrb[0].mxu0
        %1518 = vdwg.mxu0
        %v1520 = vsel %vm681, %v1366, 0
        %v1523 = vsel %vm681, %v1441, 0
        %1525 = vmatprep.subr.mxu0 0.0
        %1526 = vmatpush1.xpose.msra.mxu0 %v1523
        %1527 = vmatprep.subr.mxu0 0.0
        %1528 = vmatpush1.xpose.msra.mxu0 0.0
        %1529 = vmatprep.subr.mxu0 0.0
        %1530 = vmatpush1.xpose.msra.mxu0 0.0
        %1531 = vmatprep.subr.mxu0 0.0
        %1532 = vmatpush1.xpose.msra.mxu0 0.0
        %1533 = vmatprep.subr.mxu0 0.0
        %1534 = vmatpush1.xpose.msra.mxu0 0.0
        %1535 = vmatprep.subr.mxu0 0.0
        %1536 = vmatpush1.xpose.msra.mxu0 0.0
        %1537 = vmatprep.subr.mxu0 0.0
        %1538 = vmatpush1.xpose.msra.mxu0 0.0
        %1539 = vmatprep.subr.mxu0 0.0
        %1540 = vmatpush1.xpose.msra.mxu0 0.0
        %1541 = vmatprep.subr.mxu0 0.0
        %1542 = vmatpush1.xpose.msra.mxu0 0.0
        %1543 = vmatprep.subr.mxu0 0.0
        %1544 = vmatpush1.xpose.msra.mxu0 0.0
        %1545 = vmatprep.subr.mxu0 0.0
        %1546 = vmatpush1.xpose.msra.mxu0 0.0
        %1547 = vmatprep.subr.mxu0 0.0
        %1548 = vmatpush1.xpose.msra.mxu0 0.0
        %1549 = vmatprep.subr.mxu0 0.0
        %1550 = vmatpush1.xpose.msra.mxu0 0.0
        %1551 = vmatprep.subr.mxu0 0.0
        %1552 = vmatpush1.xpose.msra.mxu0 0.0
        %1553 = vmatprep.subr.mxu0 0.0
        %1554 = vmatpush1.xpose.msra.mxu0 0.0
        %1555 = vmatprep.subr.mxu0 0.0
        %1556 = vmatpush1.xpose.msra.mxu0 0.0
        %1557 = vmatprep.subr.mxu0 0.0
        %1558 = vmatpush1.xpose.msra.mxu0 0.0
        %1559 = vmatprep.subr.mxu0 0.0
        %1560 = vmatpush1.xpose.msra.mxu0 0.0
        %1561 = vmatprep.subr.mxu0 0.0
        %1562 = vmatpush1.xpose.msra.mxu0 0.0
        %1563 = vmatprep.subr.mxu0 0.0
        %1564 = vmatpush1.xpose.msra.mxu0 0.0
        %1565 = vmatprep.subr.mxu0 0.0
        %1566 = vmatpush1.xpose.msra.mxu0 0.0
        %1567 = vmatprep.subr.mxu0 0.0
        %1568 = vmatpush1.xpose.msra.mxu0 0.0
        %1569 = vmatprep.subr.mxu0 0.0
        %1570 = vmatpush1.xpose.msra.mxu0 0.0
        %1571 = vmatprep.subr.mxu0 0.0
        %1572 = vmatpush1.xpose.msra.mxu0 0.0
        %1573 = vmatprep.subr.mxu0 0.0
        %1574 = vmatpush1.xpose.msra.mxu0 0.0
        %1575 = vmatprep.subr.mxu0 0.0
        %1576 = vmatpush1.xpose.msra.mxu0 0.0
        %1577 = vmatprep.subr.mxu0 0.0
        %1578 = vmatpush1.xpose.msra.mxu0 0.0
        %1579 = vmatprep.subr.mxu0 0.0
        %1580 = vmatpush1.xpose.msra.mxu0 0.0
        %1581 = vmatprep.subr.mxu0 0.0
        %1582 = vmatpush1.xpose.msra.mxu0 0.0
        %1583 = vmatprep.subr.mxu0 0.0
        %1584 = vmatpush1.xpose.msra.mxu0 0.0
        %1585 = vmatprep.subr.mxu0 0.0
        %1586 = vmatpush1.xpose.msra.mxu0 0.0
        %1587 = vmatprep.subr.mxu0 0.0
        %1588 = vmatpush1.xpose.msra.mxu0 0.0
        %1589 = vmatprep.mubr.f32.mxu0 0.0
        %1590 = vmatmul.mubr.f32.gmra.mrb[0].mxu0 %v1520
        %v1591 = vpop.f32.mrb[0].mxu0
        %v1592 = vadd.f32 0.0, %v1591
        %v1593 = vpop.f32.mrb[0].mxu0
        %1594 = vdwg.mxu0
        %v1596 = vsel %vm681, %v1361, 0
        %v1599 = vsel %vm681, %v1436, 0
        %1601 = vmatprep.subr.mxu0 0.0
        %1602 = vmatpush1.xpose.msra.mxu0 %v1599
        %1603 = vmatprep.subr.mxu0 0.0
        %1604 = vmatpush1.xpose.msra.mxu0 0.0
        %1605 = vmatprep.subr.mxu0 0.0
        %1606 = vmatpush1.xpose.msra.mxu0 0.0
        %1607 = vmatprep.subr.mxu0 0.0
        %1608 = vmatpush1.xpose.msra.mxu0 0.0
        %1609 = vmatprep.subr.mxu0 0.0
        %1610 = vmatpush1.xpose.msra.mxu0 0.0
        %1611 = vmatprep.subr.mxu0 0.0
        %1612 = vmatpush1.xpose.msra.mxu0 0.0
        %1613 = vmatprep.subr.mxu0 0.0
        %1614 = vmatpush1.xpose.msra.mxu0 0.0
        %1615 = vmatprep.subr.mxu0 0.0
        %1616 = vmatpush1.xpose.msra.mxu0 0.0
        %1617 = vmatprep.subr.mxu0 0.0
        %1618 = vmatpush1.xpose.msra.mxu0 0.0
        %1619 = vmatprep.subr.mxu0 0.0
        %1620 = vmatpush1.xpose.msra.mxu0 0.0
        %1621 = vmatprep.subr.mxu0 0.0
        %1622 = vmatpush1.xpose.msra.mxu0 0.0
        %1623 = vmatprep.subr.mxu0 0.0
        %1624 = vmatpush1.xpose.msra.mxu0 0.0
        %1625 = vmatprep.subr.mxu0 0.0
        %1626 = vmatpush1.xpose.msra.mxu0 0.0
        %1627 = vmatprep.subr.mxu0 0.0
        %1628 = vmatpush1.xpose.msra.mxu0 0.0
        %1629 = vmatprep.subr.mxu0 0.0
        %1630 = vmatpush1.xpose.msra.mxu0 0.0
        %1631 = vmatprep.subr.mxu0 0.0
        %1632 = vmatpush1.xpose.msra.mxu0 0.0
        %1633 = vmatprep.subr.mxu0 0.0
        %1634 = vmatpush1.xpose.msra.mxu0 0.0
        %1635 = vmatprep.subr.mxu0 0.0
        %1636 = vmatpush1.xpose.msra.mxu0 0.0
        %1637 = vmatprep.subr.mxu0 0.0
        %1638 = vmatpush1.xpose.msra.mxu0 0.0
        %1639 = vmatprep.subr.mxu0 0.0
        %1640 = vmatpush1.xpose.msra.mxu0 0.0
        %1641 = vmatprep.subr.mxu0 0.0
        %1642 = vmatpush1.xpose.msra.mxu0 0.0
        %1643 = vmatprep.subr.mxu0 0.0
        %1644 = vmatpush1.xpose.msra.mxu0 0.0
        %1645 = vmatprep.subr.mxu0 0.0
        %1646 = vmatpush1.xpose.msra.mxu0 0.0
        %1647 = vmatprep.subr.mxu0 0.0
        %1648 = vmatpush1.xpose.msra.mxu0 0.0
        %1649 = vmatprep.subr.mxu0 0.0
        %1650 = vmatpush1.xpose.msra.mxu0 0.0
        %1651 = vmatprep.subr.mxu0 0.0
        %1652 = vmatpush1.xpose.msra.mxu0 0.0
        %1653 = vmatprep.subr.mxu0 0.0
        %1654 = vmatpush1.xpose.msra.mxu0 0.0
        %1655 = vmatprep.subr.mxu0 0.0
        %1656 = vmatpush1.xpose.msra.mxu0 0.0
        %1657 = vmatprep.subr.mxu0 0.0
        %1658 = vmatpush1.xpose.msra.mxu0 0.0
        %1659 = vmatprep.subr.mxu0 0.0
        %1660 = vmatpush1.xpose.msra.mxu0 0.0
        %1661 = vmatprep.subr.mxu0 0.0
        %1662 = vmatpush1.xpose.msra.mxu0 0.0
        %1663 = vmatprep.subr.mxu0 0.0
        %1664 = vmatpush1.xpose.msra.mxu0 0.0
        %1665 = vmatprep.mubr.f32.mxu0 0.0
        %1666 = vmatmul.mubr.f32.gmra.mrb[0].mxu0 %v1596
        %v1667 = vpop.f32.mrb[0].mxu0
        %v1668 = vadd.f32 %v1592, %v1667
        %v1669 = vpop.f32.mrb[0].mxu0
        %1670 = vdwg.mxu0
        %v1671 = vsel %vm979, %v1668, -inf
        %1672 = vmax.xlane.f32.xlu0 %v1671
        %v1673 = vpop.xlane.xlu0 %1672
        %v1674 = vsub.f32 %v1668, %v1673
        %v1675 = vmul.f32 %v1674, 1.442695
        %v1676 = vpow.pop %v1675
        %v1677 = vsel %vm979, %v1676, 0.0
        %1678 = vadd.xlane.f32.xlu0 %v1677
        %v1679 = vpop.xlane.xlu0 %1678
        %v1680 = vrcp.pop %v1679
        %v1681 = vmul.f32 %v1676, %v1680
        %v1683 = vsel %vm979, %v1681, 0
        %1685 = vmatprep.subr.mxu0 0.0
        %1686 = vmatpush1.msra.mxu0 %v1511
        %1687 = vmatprep.subr.mxu0 0.0
        %1688 = vmatpush1.msra.mxu0 0.0
        %1689 = vmatprep.subr.mxu0 0.0
        %1690 = vmatpush1.msra.mxu0 0.0
        %1691 = vmatprep.subr.mxu0 0.0
        %1692 = vmatpush1.msra.mxu0 0.0
        %1693 = vmatprep.subr.mxu0 0.0
        %1694 = vmatpush1.msra.mxu0 0.0
        %1695 = vmatprep.subr.mxu0 0.0
        %1696 = vmatpush1.msra.mxu0 0.0
        %1697 = vmatprep.subr.mxu0 0.0
        %1698 = vmatpush1.msra.mxu0 0.0
        %1699 = vmatprep.subr.mxu0 0.0
        %1700 = vmatpush1.msra.mxu0 0.0
        %1701 = vmatprep.subr.mxu0 0.0
        %1702 = vmatpush1.msra.mxu0 0.0
        %1703 = vmatprep.subr.mxu0 0.0
        %1704 = vmatpush1.msra.mxu0 0.0
        %1705 = vmatprep.subr.mxu0 0.0
        %1706 = vmatpush1.msra.mxu0 0.0
        %1707 = vmatprep.subr.mxu0 0.0
        %1708 = vmatpush1.msra.mxu0 0.0
        %1709 = vmatprep.subr.mxu0 0.0
        %1710 = vmatpush1.msra.mxu0 0.0
        %1711 = vmatprep.subr.mxu0 0.0
        %1712 = vmatpush1.msra.mxu0 0.0
        %1713 = vmatprep.subr.mxu0 0.0
        %1714 = vmatpush1.msra.mxu0 0.0
        %1715 = vmatprep.subr.mxu0 0.0
        %1716 = vmatpush1.msra.mxu0 0.0
        %1717 = vmatprep.subr.mxu0 0.0
        %1718 = vmatpush1.msra.mxu0 0.0
        %1719 = vmatprep.subr.mxu0 0.0
        %1720 = vmatpush1.msra.mxu0 0.0
        %1721 = vmatprep.subr.mxu0 0.0
        %1722 = vmatpush1.msra.mxu0 0.0
        %1723 = vmatprep.subr.mxu0 0.0
        %1724 = vmatpush1.msra.mxu0 0.0
        %1725 = vmatprep.subr.mxu0 0.0
        %1726 = vmatpush1.msra.mxu0 0.0
        %1727 = vmatprep.subr.mxu0 0.0
        %1728 = vmatpush1.msra.mxu0 0.0
        %1729 = vmatprep.subr.mxu0 0.0
        %1730 = vmatpush1.msra.mxu0 0.0
        %1731 = vmatprep.subr.mxu0 0.0
        %1732 = vmatpush1.msra.mxu0 0.0
        %1733 = vmatprep.subr.mxu0 0.0
        %1734 = vmatpush1.msra.mxu0 0.0
        %1735 = vmatprep.subr.mxu0 0.0
        %1736 = vmatpush1.msra.mxu0 0.0
        %1737 = vmatprep.subr.mxu0 0.0
        %1738 = vmatpush1.msra.mxu0 0.0
        %1739 = vmatprep.subr.mxu0 0.0
        %1740 = vmatpush1.msra.mxu0 0.0
        %1741 = vmatprep.subr.mxu0 0.0
        %1742 = vmatpush1.msra.mxu0 0.0
        %1743 = vmatprep.subr.mxu0 0.0
        %1744 = vmatpush1.msra.mxu0 0.0
        %1745 = vmatprep.subr.mxu0 0.0
        %1746 = vmatpush1.msra.mxu0 0.0
        %1747 = vmatprep.subr.mxu0 0.0
        %1748 = vmatpush1.msra.mxu0 0.0
        %1749 = vmatprep.mubr.f32.mxu0 0.0
        %1750 = vmatmul.mubr.f32.gmra.mrb[0].mxu0 %v1683
        %v1751 = vpop.f32.mrb[0].mxu0
        %v1752 = vadd.f32 0.0, %v1751
        %v1753 = vpop.f32.mrb[0].mxu0
        %1754 = vdwg.mxu0
        %1755 = vmatprep.subr.mxu0 0.0
        %1756 = vmatpush1.msra.mxu0 %v1516
        %1757 = vmatprep.subr.mxu0 0.0
        %1758 = vmatpush1.msra.mxu0 0.0
        %1759 = vmatprep.subr.mxu0 0.0
        %1760 = vmatpush1.msra.mxu0 0.0
        %1761 = vmatprep.subr.mxu0 0.0
        %1762 = vmatpush1.msra.mxu0 0.0
        %1763 = vmatprep.subr.mxu0 0.0
        %1764 = vmatpush1.msra.mxu0 0.0
        %1765 = vmatprep.subr.mxu0 0.0
        %1766 = vmatpush1.msra.mxu0 0.0
        %1767 = vmatprep.subr.mxu0 0.0
        %1768 = vmatpush1.msra.mxu0 0.0
        %1769 = vmatprep.subr.mxu0 0.0
        %1770 = vmatpush1.msra.mxu0 0.0
        %1771 = vmatprep.subr.mxu0 0.0
        %1772 = vmatpush1.msra.mxu0 0.0
        %1773 = vmatprep.subr.mxu0 0.0
        %1774 = vmatpush1.msra.mxu0 0.0
        %1775 = vmatprep.subr.mxu0 0.0
        %1776 = vmatpush1.msra.mxu0 0.0
        %1777 = vmatprep.subr.mxu0 0.0
        %1778 = vmatpush1.msra.mxu0 0.0
        %1779 = vmatprep.subr.mxu0 0.0
        %1780 = vmatpush1.msra.mxu0 0.0
        %1781 = vmatprep.subr.mxu0 0.0
        %1782 = vmatpush1.msra.mxu0 0.0
        %1783 = vmatprep.subr.mxu0 0.0
        %1784 = vmatpush1.msra.mxu0 0.0
        %1785 = vmatprep.subr.mxu0 0.0
        %1786 = vmatpush1.msra.mxu0 0.0
        %1787 = vmatprep.subr.mxu0 0.0
        %1788 = vmatpush1.msra.mxu0 0.0
        %1789 = vmatprep.subr.mxu0 0.0
        %1790 = vmatpush1.msra.mxu0 0.0
        %1791 = vmatprep.subr.mxu0 0.0
        %1792 = vmatpush1.msra.mxu0 0.0
        %1793 = vmatprep.subr.mxu0 0.0
        %1794 = vmatpush1.msra.mxu0 0.0
        %1795 = vmatprep.subr.mxu0 0.0
        %1796 = vmatpush1.msra.mxu0 0.0
        %1797 = vmatprep.subr.mxu0 0.0
        %1798 = vmatpush1.msra.mxu0 0.0
        %1799 = vmatprep.subr.mxu0 0.0
        %1800 = vmatpush1.msra.mxu0 0.0
        %1801 = vmatprep.subr.mxu0 0.0
        %1802 = vmatpush1.msra.mxu0 0.0
        %1803 = vmatprep.subr.mxu0 0.0
        %1804 = vmatpush1.msra.mxu0 0.0
        %1805 = vmatprep.subr.mxu0 0.0
        %1806 = vmatpush1.msra.mxu0 0.0
        %1807 = vmatprep.subr.mxu0 0.0
        %1808 = vmatpush1.msra.mxu0 0.0
        %1809 = vmatprep.subr.mxu0 0.0
        %1810 = vmatpush1.msra.mxu0 0.0
        %1811 = vmatprep.subr.mxu0 0.0
        %1812 = vmatpush1.msra.mxu0 0.0
        %1813 = vmatprep.subr.mxu0 0.0
        %1814 = vmatpush1.msra.mxu0 0.0
        %1815 = vmatprep.subr.mxu0 0.0
        %1816 = vmatpush1.msra.mxu0 0.0
        %1817 = vmatprep.subr.mxu0 0.0
        %1818 = vmatpush1.msra.mxu0 0.0
        %1819 = vmatprep.mubr.f32.mxu0 0.0
        %1820 = vmatmul.mubr.f32.gmra.mrb[0].mxu0 %v1683
        %v1821 = vpop.f32.mrb[0].mxu0
        %v1822 = vadd.f32 0.0, %v1821
        %v1823 = vpop.f32.mrb[0].mxu0
        %1824 = vdwg.mxu0
        %v1825 = vld [vmem:[%s10] sm:$0xff]
        %vm1826 = vcmask 130048
        %v1828 = vsel %vm1826, %v1825, 0
        %1830 = vmatprep.subr.mxu0 0.0
        %1831 = vmatpush1.msra.mxu0 %v1752
        %1832 = vmatprep.subr.mxu0 0.0
        %1833 = vmatpush1.msra.mxu0 %v1822
        %1834 = vmatprep.subr.mxu0 0.0
        %1835 = vmatpush1.msra.mxu0 0.0
        %1836 = vmatprep.subr.mxu0 0.0
        %1837 = vmatpush1.msra.mxu0 0.0
        %1838 = vmatprep.subr.mxu0 0.0
        %1839 = vmatpush1.msra.mxu0 0.0
        %1840 = vmatprep.subr.mxu0 0.0
        %1841 = vmatpush1.msra.mxu0 0.0
        %1842 = vmatprep.subr.mxu0 0.0
        %1843 = vmatpush1.msra.mxu0 0.0
        %1844 = vmatprep.subr.mxu0 0.0
        %1845 = vmatpush1.msra.mxu0 0.0
        %1846 = vmatprep.subr.mxu0 0.0
        %1847 = vmatpush1.msra.mxu0 0.0
        %1848 = vmatprep.subr.mxu0 0.0
        %1849 = vmatpush1.msra.mxu0 0.0
        %1850 = vmatprep.subr.mxu0 0.0
        %1851 = vmatpush1.msra.mxu0 0.0
        %1852 = vmatprep.subr.mxu0 0.0
        %1853 = vmatpush1.msra.mxu0 0.0
        %1854 = vmatprep.subr.mxu0 0.0
        %1855 = vmatpush1.msra.mxu0 0.0
        %1856 = vmatprep.subr.mxu0 0.0
        %1857 = vmatpush1.msra.mxu0 0.0
        %1858 = vmatprep.subr.mxu0 0.0
        %1859 = vmatpush1.msra.mxu0 0.0
        %1860 = vmatprep.subr.mxu0 0.0
        %1861 = vmatpush1.msra.mxu0 0.0
        %1862 = vmatprep.subr.mxu0 0.0
        %1863 = vmatpush1.msra.mxu0 0.0
        %1864 = vmatprep.subr.mxu0 0.0
        %1865 = vmatpush1.msra.mxu0 0.0
        %1866 = vmatprep.subr.mxu0 0.0
        %1867 = vmatpush1.msra.mxu0 0.0
        %1868 = vmatprep.subr.mxu0 0.0
        %1869 = vmatpush1.msra.mxu0 0.0
        %1870 = vmatprep.subr.mxu0 0.0
        %1871 = vmatpush1.msra.mxu0 0.0
        %1872 = vmatprep.subr.mxu0 0.0
        %1873 = vmatpush1.msra.mxu0 0.0
        %1874 = vmatprep.subr.mxu0 0.0
        %1875 = vmatpush1.msra.mxu0 0.0
        %1876 = vmatprep.subr.mxu0 0.0
        %1877 = vmatpush1.msra.mxu0 0.0
        %1878 = vmatprep.subr.mxu0 0.0
        %1879 = vmatpush1.msra.mxu0 0.0
        %1880 = vmatprep.subr.mxu0 0.0
        %1881 = vmatpush1.msra.mxu0 0.0
        %1882 = vmatprep.subr.mxu0 0.0
        %1883 = vmatpush1.msra.mxu0 0.0
        %1884 = vmatprep.subr.mxu0 0.0
        %1885 = vmatpush1.msra.mxu0 0.0
        %1886 = vmatprep.subr.mxu0 0.0
        %1887 = vmatpush1.msra.mxu0 0.0
        %1888 = vmatprep.subr.mxu0 0.0
        %1889 = vmatpush1.msra.mxu0 0.0
        %1890 = vmatprep.subr.mxu0 0.0
        %1891 = vmatpush1.msra.mxu0 0.0
        %1892 = vmatprep.subr.mxu0 0.0
        %1893 = vmatpush1.msra.mxu0 0.0
        %1894 = vmatprep.mubr.f32.mxu0 0.0
        %1895 = vmatmul.mubr.f32.gmra.mrb[0].mxu0 %v1828
        %v1896 = vpop.f32.mrb[0].mxu0
        %v1897 = vadd.f32 0.0, %v1896
        %v1898 = vpop.f32.mrb[0].mxu0
        %1899 = vdwg.mxu0
        %v1900 = vld [vmem:[#allocation7] sm:$0xff]
        %v1901 = vld [vmem:[#allocation7 + $0x8] sm:$0xff]
        %v1902 = vld [vmem:[#allocation7 + $0x10] sm:$0xff]
        %v1903 = vld [vmem:[#allocation7 + $0x18] sm:$0xff]
        %v1904 = vld [vmem:[#allocation9] sm:$0xff]
        %v1905 = vld [vmem:[#allocation9 + $0x8] sm:$0xff]
        %v1906 = vld [vmem:[#allocation9 + $0x10] sm:$0xff]
        %v1907 = vld [vmem:[#allocation9 + $0x18] sm:$0xff]
        %v1909 = vsel %vm681, %v1897, 0
        %1911 = vmatprep.subr.mxu0 0.0
        %1912 = vmatpush1.msra.mxu0 %v1904
        %1913 = vmatprep.subr.mxu0 0.0
        %1914 = vmatpush1.msra.mxu0 %v1905
        %1915 = vmatprep.subr.mxu0 0.0
        %1916 = vmatpush1.msra.mxu0 %v1906
        %1917 = vmatprep.subr.mxu0 0.0
        %1918 = vmatpush1.msra.mxu0 %v1907
        %1919 = vmatprep.subr.mxu0 0.0
        %1920 = vmatpush1.msra.mxu0 0.0
        %1921 = vmatprep.subr.mxu0 0.0
        %1922 = vmatpush1.msra.mxu0 0.0
        %1923 = vmatprep.subr.mxu0 0.0
        %1924 = vmatpush1.msra.mxu0 0.0
        %1925 = vmatprep.subr.mxu0 0.0
        %1926 = vmatpush1.msra.mxu0 0.0
        %1927 = vmatprep.subr.mxu0 0.0
        %1928 = vmatpush1.msra.mxu0 0.0
        %1929 = vmatprep.subr.mxu0 0.0
        %1930 = vmatpush1.msra.mxu0 0.0
        %1931 = vmatprep.subr.mxu0 0.0
        %1932 = vmatpush1.msra.mxu0 0.0
        %1933 = vmatprep.subr.mxu0 0.0
        %1934 = vmatpush1.msra.mxu0 0.0
        %1935 = vmatprep.subr.mxu0 0.0
        %1936 = vmatpush1.msra.mxu0 0.0
        %1937 = vmatprep.subr.mxu0 0.0
        %1938 = vmatpush1.msra.mxu0 0.0
        %1939 = vmatprep.subr.mxu0 0.0
        %1940 = vmatpush1.msra.mxu0 0.0
        %1941 = vmatprep.subr.mxu0 0.0
        %1942 = vmatpush1.msra.mxu0 0.0
        %1943 = vmatprep.subr.mxu0 0.0
        %1944 = vmatpush1.msra.mxu0 0.0
        %1945 = vmatprep.subr.mxu0 0.0
        %1946 = vmatpush1.msra.mxu0 0.0
        %1947 = vmatprep.subr.mxu0 0.0
        %1948 = vmatpush1.msra.mxu0 0.0
        %1949 = vmatprep.subr.mxu0 0.0
        %1950 = vmatpush1.msra.mxu0 0.0
        %1951 = vmatprep.subr.mxu0 0.0
        %1952 = vmatpush1.msra.mxu0 0.0
        %1953 = vmatprep.subr.mxu0 0.0
        %1954 = vmatpush1.msra.mxu0 0.0
        %1955 = vmatprep.subr.mxu0 0.0
        %1956 = vmatpush1.msra.mxu0 0.0
        %1957 = vmatprep.subr.mxu0 0.0
        %1958 = vmatpush1.msra.mxu0 0.0
        %1959 = vmatprep.subr.mxu0 0.0
        %1960 = vmatpush1.msra.mxu0 0.0
        %1961 = vmatprep.subr.mxu0 0.0
        %1962 = vmatpush1.msra.mxu0 0.0
        %1963 = vmatprep.subr.mxu0 0.0
        %1964 = vmatpush1.msra.mxu0 0.0
        %1965 = vmatprep.subr.mxu0 0.0
        %1966 = vmatpush1.msra.mxu0 0.0
        %1967 = vmatprep.subr.mxu0 0.0
        %1968 = vmatpush1.msra.mxu0 0.0
        %1969 = vmatprep.subr.mxu0 0.0
        %1970 = vmatpush1.msra.mxu0 0.0
        %1971 = vmatprep.subr.mxu0 0.0
        %1972 = vmatpush1.msra.mxu0 0.0
        %1973 = vmatprep.subr.mxu0 0.0
        %1974 = vmatpush1.msra.mxu0 0.0
        %1975 = vmatprep.mubr.f32.mxu0 0.0
        %1976 = vmatmul.mubr.f32.gmra.mrb[0].mxu0 %v1909
        %v1977 = vpop.f32.mrb[0].mxu0
        %v1978 = vadd.f32 0.0, %v1977
        %v1979 = vpop.f32.mrb[0].mxu0
        %1980 = vdwg.mxu0
        %v1982 = vsel %vm681, %v1061, 0
        %1984 = vmatprep.subr.mxu0 0.0
        %1985 = vmatpush1.msra.mxu0 %v1900
        %1986 = vmatprep.subr.mxu0 0.0
        %1987 = vmatpush1.msra.mxu0 %v1901
        %1988 = vmatprep.subr.mxu0 0.0
        %1989 = vmatpush1.msra.mxu0 %v1902
        %1990 = vmatprep.subr.mxu0 0.0
        %1991 = vmatpush1.msra.mxu0 %v1903
        %1992 = vmatprep.subr.mxu0 0.0
        %1993 = vmatpush1.msra.mxu0 0.0
        %1994 = vmatprep.subr.mxu0 0.0
        %1995 = vmatpush1.msra.mxu0 0.0
        %1996 = vmatprep.subr.mxu0 0.0
        %1997 = vmatpush1.msra.mxu0 0.0
        %1998 = vmatprep.subr.mxu0 0.0
        %1999 = vmatpush1.msra.mxu0 0.0
        %2000 = vmatprep.subr.mxu0 0.0
        %2001 = vmatpush1.msra.mxu0 0.0
        %2002 = vmatprep.subr.mxu0 0.0
        %2003 = vmatpush1.msra.mxu0 0.0
        %2004 = vmatprep.subr.mxu0 0.0
        %2005 = vmatpush1.msra.mxu0 0.0
        %2006 = vmatprep.subr.mxu0 0.0
        %2007 = vmatpush1.msra.mxu0 0.0
        %2008 = vmatprep.subr.mxu0 0.0
        %2009 = vmatpush1.msra.mxu0 0.0
        %2010 = vmatprep.subr.mxu0 0.0
        %2011 = vmatpush1.msra.mxu0 0.0
        %2012 = vmatprep.subr.mxu0 0.0
        %2013 = vmatpush1.msra.mxu0 0.0
        %2014 = vmatprep.subr.mxu0 0.0
        %2015 = vmatpush1.msra.mxu0 0.0
        %2016 = vmatprep.subr.mxu0 0.0
        %2017 = vmatpush1.msra.mxu0 0.0
        %2018 = vmatprep.subr.mxu0 0.0
        %2019 = vmatpush1.msra.mxu0 0.0
        %2020 = vmatprep.subr.mxu0 0.0
        %2021 = vmatpush1.msra.mxu0 0.0
        %2022 = vmatprep.subr.mxu0 0.0
        %2023 = vmatpush1.msra.mxu0 0.0
        %2024 = vmatprep.subr.mxu0 0.0
        %2025 = vmatpush1.msra.mxu0 0.0
        %2026 = vmatprep.subr.mxu0 0.0
        %2027 = vmatpush1.msra.mxu0 0.0
        %2028 = vmatprep.subr.mxu0 0.0
        %2029 = vmatpush1.msra.mxu0 0.0
        %2030 = vmatprep.subr.mxu0 0.0
        %2031 = vmatpush1.msra.mxu0 0.0
        %2032 = vmatprep.subr.mxu0 0.0
        %2033 = vmatpush1.msra.mxu0 0.0
        %2034 = vmatprep.subr.mxu0 0.0
        %2035 = vmatpush1.msra.mxu0 0.0
        %2036 = vmatprep.subr.mxu0 0.0
        %2037 = vmatpush1.msra.mxu0 0.0
        %2038 = vmatprep.subr.mxu0 0.0
        %2039 = vmatpush1.msra.mxu0 0.0
        %2040 = vmatprep.subr.mxu0 0.0
        %2041 = vmatpush1.msra.mxu0 0.0
        %2042 = vmatprep.subr.mxu0 0.0
        %2043 = vmatpush1.msra.mxu0 0.0
        %2044 = vmatprep.subr.mxu0 0.0
        %2045 = vmatpush1.msra.mxu0 0.0
        %2046 = vmatprep.subr.mxu0 0.0
        %2047 = vmatpush1.msra.mxu0 0.0
        %2048 = vmatprep.mubr.f32.mxu0 0.0
        %2049 = vmatmul.mubr.f32.gmra.mrb[0].mxu0 %v1982
        %v2050 = vpop.f32.mrb[0].mxu0
        %v2051 = vadd.f32 %v1978, %v2050
        %v2052 = vpop.f32.mrb[0].mxu0
        %2053 = vdwg.mxu0
        %v2054 = vadd.f32 %v676, %v2051
        %v2055 = vld [vmem:[%s16] sm:$0xff]
        %s2056 = scalar_lea.vmem %s16, 8
        %v2057 = vld [vmem:[%s2056] sm:$0xff]
        %v2058 = vsel %vm681, %v2054, 0.0
        %2059 = vadd.xlane.f32.xlu0 %v2058
        %v2060 = vpop.xlane.xlu0 %2059
        %v2061 = vrcp.pop 32.0
        %v2062 = vmul.f32 %v2060, %v2061
        %v2063 = vsub.f32 %v2054, %v2062
        %v2064 = vmul.f32 %v2063, %v2063
        %v2065 = vsel %vm681, %v2064, 0.0
        %2066 = vadd.xlane.f32.xlu0 %v2065
        %v2067 = vpop.xlane.xlu0 %2066
        %v2068 = vmul.f32 %v2067, %v2061
        %v2069 = vadd.f32 %v2068, 1e-05
        %v2070 = vrsqrt.pop %v2069
        %v2071 = vmul.f32 %v2063, %v2070
        %v2072 = vmul.f32 %v2071, %v2055
        %v2073 = vadd.f32 %v2072, %v2057
        %v2074 = vld [vmem:[#allocation10] sm:$0xff]
        %v2075 = vld [vmem:[#allocation10 + $0x8] sm:$0xff]
        %v2076 = vld [vmem:[#allocation10 + $0x10] sm:$0xff]
        %v2077 = vld [vmem:[#allocation10 + $0x18] sm:$0xff]
        %v2078 = vld [vmem:[#allocation12] sm:$0xff]
        %v2080 = vsel %vm681, %v2073, 0
        %2082 = vmatprep.subr.mxu0 0.0
        %2083 = vmatpush1.msra.mxu0 %v2074
        %2084 = vmatprep.subr.mxu0 0.0
        %2085 = vmatpush1.msra.mxu0 %v2075
        %2086 = vmatprep.subr.mxu0 0.0
        %2087 = vmatpush1.msra.mxu0 %v2076
        %2088 = vmatprep.subr.mxu0 0.0
        %2089 = vmatpush1.msra.mxu0 %v2077
        %2090 = vmatprep.subr.mxu0 0.0
        %2091 = vmatpush1.msra.mxu0 0.0
        %2092 = vmatprep.subr.mxu0 0.0
        %2093 = vmatpush1.msra.mxu0 0.0
        %2094 = vmatprep.subr.mxu0 0.0
        %2095 = vmatpush1.msra.mxu0 0.0
        %2096 = vmatprep.subr.mxu0 0.0
        %2097 = vmatpush1.msra.mxu0 0.0
        %2098 = vmatprep.subr.mxu0 0.0
        %2099 = vmatpush1.msra.mxu0 0.0
        %2100 = vmatprep.subr.mxu0 0.0
        %2101 = vmatpush1.msra.mxu0 0.0
        %2102 = vmatprep.subr.mxu0 0.0
        %2103 = vmatpush1.msra.mxu0 0.0
        %2104 = vmatprep.subr.mxu0 0.0
        %2105 = vmatpush1.msra.mxu0 0.0
        %2106 = vmatprep.subr.mxu0 0.0
        %2107 = vmatpush1.msra.mxu0 0.0
        %2108 = vmatprep.subr.mxu0 0.0
        %2109 = vmatpush1.msra.mxu0 0.0
        %2110 = vmatprep.subr.mxu0 0.0
        %2111 = vmatpush1.msra.mxu0 0.0
        %2112 = vmatprep.subr.mxu0 0.0
        %2113 = vmatpush1.msra.mxu0 0.0
        %2114 = vmatprep.subr.mxu0 0.0
        %2115 = vmatpush1.msra.mxu0 0.0
        %2116 = vmatprep.subr.mxu0 0.0
        %2117 = vmatpush1.msra.mxu0 0.0
        %2118 = vmatprep.subr.mxu0 0.0
        %2119 = vmatpush1.msra.mxu0 0.0
        %2120 = vmatprep.subr.mxu0 0.0
        %2121 = vmatpush1.msra.mxu0 0.0
        %2122 = vmatprep.subr.mxu0 0.0
        %2123 = vmatpush1.msra.mxu0 0.0
        %2124 = vmatprep.subr.mxu0 0.0
        %2125 = vmatpush1.msra.mxu0 0.0
        %2126 = vmatprep.subr.mxu0 0.0
        %2127 = vmatpush1.msra.mxu0 0.0
        %2128 = vmatprep.subr.mxu0 0.0
        %2129 = vmatpush1.msra.mxu0 0.0
        %2130 = vmatprep.subr.mxu0 0.0
        %2131 = vmatpush1.msra.mxu0 0.0
        %2132 = vmatprep.subr.mxu0 0.0
        %2133 = vmatpush1.msra.mxu0 0.0
        %2134 = vmatprep.subr.mxu0 0.0
        %2135 = vmatpush1.msra.mxu0 0.0
        %2136 = vmatprep.subr.mxu0 0.0
        %2137 = vmatpush1.msra.mxu0 0.0
        %2138 = vmatprep.subr.mxu0 0.0
        %2139 = vmatpush1.msra.mxu0 0.0
        %2140 = vmatprep.subr.mxu0 0.0
        %2141 = vmatpush1.msra.mxu0 0.0
        %2142 = vmatprep.subr.mxu0 0.0
        %2143 = vmatpush1.msra.mxu0 0.0
        %2144 = vmatprep.subr.mxu0 0.0
        %2145 = vmatpush1.msra.mxu0 0.0
        %2146 = vmatprep.mubr.f32.mxu0 0.0
        %2147 = vmatmul.mubr.f32.gmra.mrb[0].mxu0 %v2080
        %v2148 = vpop.f32.mrb[0].mxu0
        %v2149 = vadd.f32 %v2078, %v2148
        %v2150 = vpop.f32.mrb[0].mxu0
        %2151 = vdwg.mxu0
        %v2152 = vmax.f32 %v2149, 0.0
        %v2153 = vld [vmem:[%s13] sm:$0xff]
        %v2154 = vld [vmem:[%s13 + $0x8] sm:$0xff]
        %v2155 = vld [vmem:[%s13 + $0x10] sm:$0xff]
        %v2156 = vld [vmem:[%s13 + $0x18] sm:$0xff]
        %v2157 = vld [vmem:[%s13 + $0x20] sm:$0xff]
        %v2158 = vld [vmem:[%s13 + $0x28] sm:$0xff]
        %v2159 = vld [vmem:[%s13 + $0x30] sm:$0xff]
        %v2160 = vld [vmem:[%s13 + $0x38] sm:$0xff]
        %v2161 = vld [vmem:[%s13 + $0x40] sm:$0xff]
        %v2162 = vld [vmem:[%s13 + $0x48] sm:$0xff]
        %v2163 = vld [vmem:[%s13 + $0x50] sm:$0xff]
        %v2164 = vld [vmem:[%s13 + $0x58] sm:$0xff]
        %v2165 = vld [vmem:[%s13 + $0x60] sm:$0xff]
        %v2166 = vld [vmem:[%s13 + $0x68] sm:$0xff]
        %v2167 = vld [vmem:[%s13 + $0x70] sm:$0xff]
        %v2168 = vld [vmem:[%s13 + $0x78] sm:$0xff]
        %s2169 = scalar_lea.vmem %s16, 48
        %v2170 = vld [vmem:[%s2169] sm:$0xff]
        %2171 = vmatprep.subr.mxu0 0.0
        %2172 = vmatpush1.msra.mxu0 %v2153
        %2173 = vmatprep.subr.mxu0 0.0
        %2174 = vmatpush1.msra.mxu0 %v2154
        %2175 = vmatprep.subr.mxu0 0.0
        %2176 = vmatpush1.msra.mxu0 %v2155
        %2177 = vmatprep.subr.mxu0 0.0
        %2178 = vmatpush1.msra.mxu0 %v2156
        %2179 = vmatprep.subr.mxu0 0.0
        %2180 = vmatpush1.msra.mxu0 %v2157
        %2181 = vmatprep.subr.mxu0 0.0
        %2182 = vmatpush1.msra.mxu0 %v2158
        %2183 = vmatprep.subr.mxu0 0.0
        %2184 = vmatpush1.msra.mxu0 %v2159
        %2185 = vmatprep.subr.mxu0 0.0
        %2186 = vmatpush1.msra.mxu0 %v2160
        %2187 = vmatprep.subr.mxu0 0.0
        %2188 = vmatpush1.msra.mxu0 %v2161
        %2189 = vmatprep.subr.mxu0 0.0
        %2190 = vmatpush1.msra.mxu0 %v2162
        %2191 = vmatprep.subr.mxu0 0.0
        %2192 = vmatpush1.msra.mxu0 %v2163
        %2193 = vmatprep.subr.mxu0 0.0
        %2194 = vmatpush1.msra.mxu0 %v2164
        %2195 = vmatprep.subr.mxu0 0.0
        %2196 = vmatpush1.msra.mxu0 %v2165
        %2197 = vmatprep.subr.mxu0 0.0
        %2198 = vmatpush1.msra.mxu0 %v2166
        %2199 = vmatprep.subr.mxu0 0.0
        %2200 = vmatpush1.msra.mxu0 %v2167
        %2201 = vmatprep.subr.mxu0 0.0
        %2202 = vmatpush1.msra.mxu0 %v2168
        %2203 = vmatprep.subr.mxu0 0.0
        %2204 = vmatpush1.msra.mxu0 0.0
        %2205 = vmatprep.subr.mxu0 0.0
        %2206 = vmatpush1.msra.mxu0 0.0
        %2207 = vmatprep.subr.mxu0 0.0
        %2208 = vmatpush1.msra.mxu0 0.0
        %2209 = vmatprep.subr.mxu0 0.0
        %2210 = vmatpush1.msra.mxu0 0.0
        %2211 = vmatprep.subr.mxu0 0.0
        %2212 = vmatpush1.msra.mxu0 0.0
        %2213 = vmatprep.subr.mxu0 0.0
        %2214 = vmatpush1.msra.mxu0 0.0
        %2215 = vmatprep.subr.mxu0 0.0
        %2216 = vmatpush1.msra.mxu0 0.0
        %2217 = vmatprep.subr.mxu0 0.0
        %2218 = vmatpush1.msra.mxu0 0.0
        %2219 = vmatprep.subr.mxu0 0.0
        %2220 = vmatpush1.msra.mxu0 0.0
        %2221 = vmatprep.subr.mxu0 0.0
        %2222 = vmatpush1.msra.mxu0 0.0
        %2223 = vmatprep.subr.mxu0 0.0
        %2224 = vmatpush1.msra.mxu0 0.0
        %2225 = vmatprep.subr.mxu0 0.0
        %2226 = vmatpush1.msra.mxu0 0.0
        %2227 = vmatprep.subr.mxu0 0.0
        %2228 = vmatpush1.msra.mxu0 0.0
        %2229 = vmatprep.subr.mxu0 0.0
        %2230 = vmatpush1.msra.mxu0 0.0
        %2231 = vmatprep.subr.mxu0 0.0
        %2232 = vmatpush1.msra.mxu0 0.0
        %2233 = vmatprep.subr.mxu0 0.0
        %2234 = vmatpush1.msra.mxu0 0.0
        %2235 = vmatprep.mubr.f32.mxu0 0.0
        %2236 = vmatmul.mubr.f32.gmra.mrb[0].mxu0 %v2152
        %v2237 = vpop.f32.mrb[0].mxu0
        %v2238 = vadd.f32 %v2170, %v2237
        %v2239 = vpop.f32.mrb[0].mxu0
        %2240 = vdwg.mxu0
        %v2241 = vadd.f32 %v2073, %v2238
        %s2242 = scalar_lea.vmem %s16, 16
        %v2243 = vld [vmem:[%s2242] sm:$0xff]
        %s2244 = scalar_lea.vmem %s16, 24
        %v2245 = vld [vmem:[%s2244] sm:$0xff]
        %v2246 = vsel %vm681, %v2241, 0.0
        %2247 = vadd.xlane.f32.xlu0 %v2246
        %v2248 = vpop.xlane.xlu0 %2247
        %v2249 = vmul.f32 %v2248, %v2061
        %v2250 = vsub.f32 %v2241, %v2249
        %v2251 = vmul.f32 %v2250, %v2250
        %v2252 = vsel %vm681, %v2251, 0.0
        %2253 = vadd.xlane.f32.xlu0 %v2252
        %v2254 = vpop.xlane.xlu0 %2253
        %v2255 = vmul.f32 %v2254, %v2061
        %v2256 = vadd.f32 %v2255, 1e-05
        %v2257 = vrsqrt.pop %v2256
        %v2258 = vmul.f32 %v2250, %v2257
        %v2259 = vmul.f32 %v2258, %v2243
        %v2260 = vadd.f32 %v2259, %v2245
        %s2261 = scalar_lea.vmem %s16, 32
        %v2262 = vld [vmem:[%s2261] sm:$0xff]
        %s2263 = scalar_lea.vmem %s16, 40
        %v2264 = vld [vmem:[%s2263] sm:$0xff]
        %v2265 = vsel %vm681, %v2260, 0.0
        %2266 = vadd.xlane.f32.xlu0 %v2265
        %v2267 = vpop.xlane.xlu0 %2266
        %v2268 = vmul.f32 %v2267, %v2061
        %v2269 = vsub.f32 %v2260, %v2268
        %v2270 = vmul.f32 %v2269, %v2269
        %v2271 = vsel %vm681, %v2270, 0.0
        %2272 = vadd.xlane.f32.xlu0 %v2271
        %v2273 = vpop.xlane.xlu0 %2272
        %v2274 = vmul.f32 %v2273, %v2061
        %v2275 = vadd.f32 %v2274, 1e-05
        %v2276 = vrsqrt.pop %v2275
        %v2277 = vmul.f32 %v2269, %v2276
        %v2278 = vmul.f32 %v2277, %v2262
        %v2279 = vadd.f32 %v2278, %v2264
        %v2280 = vld [vmem:[#allocation13] sm:$0xff]
        %v2281 = vld [vmem:[#allocation13 + $0x8] sm:$0xff]
        %v2282 = vld [vmem:[#allocation13 + $0x10] sm:$0xff]
        %v2283 = vld [vmem:[#allocation13 + $0x18] sm:$0xff]
        %v2284 = vld [vmem:[#allocation15] sm:$0xff]
        %v2286 = vsel %vm681, %v2279, 0
        %2288 = vmatprep.subr.mxu0 0.0
        %2289 = vmatpush1.msra.mxu0 %v2280
        %2290 = vmatprep.subr.mxu0 0.0
        %2291 = vmatpush1.msra.mxu0 %v2281
        %2292 = vmatprep.subr.mxu0 0.0
        %2293 = vmatpush1.msra.mxu0 %v2282
        %2294 = vmatprep.subr.mxu0 0.0
        %2295 = vmatpush1.msra.mxu0 %v2283
        %2296 = vmatprep.subr.mxu0 0.0
        %2297 = vmatpush1.msra.mxu0 0.0
        %2298 = vmatprep.subr.mxu0 0.0
        %2299 = vmatpush1.msra.mxu0 0.0
        %2300 = vmatprep.subr.mxu0 0.0
        %2301 = vmatpush1.msra.mxu0 0.0
        %2302 = vmatprep.subr.mxu0 0.0
        %2303 = vmatpush1.msra.mxu0 0.0
        %2304 = vmatprep.subr.mxu0 0.0
        %2305 = vmatpush1.msra.mxu0 0.0
        %2306 = vmatprep.subr.mxu0 0.0
        %2307 = vmatpush1.msra.mxu0 0.0
        %2308 = vmatprep.subr.mxu0 0.0
        %2309 = vmatpush1.msra.mxu0 0.0
        %2310 = vmatprep.subr.mxu0 0.0
        %2311 = vmatpush1.msra.mxu0 0.0
        %2312 = vmatprep.subr.mxu0 0.0
        %2313 = vmatpush1.msra.mxu0 0.0
        %2314 = vmatprep.subr.mxu0 0.0
        %2315 = vmatpush1.msra.mxu0 0.0
        %2316 = vmatprep.subr.mxu0 0.0
        %2317 = vmatpush1.msra.mxu0 0.0
        %2318 = vmatprep.subr.mxu0 0.0
        %2319 = vmatpush1.msra.mxu0 0.0
        %2320 = vmatprep.subr.mxu0 0.0
        %2321 = vmatpush1.msra.mxu0 0.0
        %2322 = vmatprep.subr.mxu0 0.0
        %2323 = vmatpush1.msra.mxu0 0.0
        %2324 = vmatprep.subr.mxu0 0.0
        %2325 = vmatpush1.msra.mxu0 0.0
        %2326 = vmatprep.subr.mxu0 0.0
        %2327 = vmatpush1.msra.mxu0 0.0
        %2328 = vmatprep.subr.mxu0 0.0
        %2329 = vmatpush1.msra.mxu0 0.0
        %2330 = vmatprep.subr.mxu0 0.0
        %2331 = vmatpush1.msra.mxu0 0.0
        %2332 = vmatprep.subr.mxu0 0.0
        %2333 = vmatpush1.msra.mxu0 0.0
        %2334 = vmatprep.subr.mxu0 0.0
        %2335 = vmatpush1.msra.mxu0 0.0
        %2336 = vmatprep.subr.mxu0 0.0
        %2337 = vmatpush1.msra.mxu0 0.0
        %2338 = vmatprep.subr.mxu0 0.0
        %2339 = vmatpush1.msra.mxu0 0.0
        %2340 = vmatprep.subr.mxu0 0.0
        %2341 = vmatpush1.msra.mxu0 0.0
        %2342 = vmatprep.subr.mxu0 0.0
        %2343 = vmatpush1.msra.mxu0 0.0
        %2344 = vmatprep.subr.mxu0 0.0
        %2345 = vmatpush1.msra.mxu0 0.0
        %2346 = vmatprep.subr.mxu0 0.0
        %2347 = vmatpush1.msra.mxu0 0.0
        %2348 = vmatprep.subr.mxu0 0.0
        %2349 = vmatpush1.msra.mxu0 0.0
        %2350 = vmatprep.subr.mxu0 0.0
        %2351 = vmatpush1.msra.mxu0 0.0
        %2352 = vmatprep.mubr.f32.mxu0 0.0
        %2353 = vmatmul.mubr.f32.gmra.mrb[0].mxu0 %v2286
        %v2354 = vpop.f32.mrb[0].mxu0
        %v2355 = vadd.f32 %v2284, %v2354
        %v2356 = vpop.f32.mrb[0].mxu0
        %2357 = vdwg.mxu0
        %2358 = vst [vmem:[%s675] sm:$0xff] %v2355
        %p2359 = scmp.lt.s32.totalorder %s35, 1
        %s2360 = scalar_select %p2359, %s35, 1
        %s2361 = smul.addr %s2360, 8
        %s2362 = scalar_lea.vmem %s17, %s2361
        // Predicated region
        $region125: #{ts_model_forward.1} parent=87 // pred_check
          %p2363 = pneg %p415
        $region126: #{ts_model_forward.1} parent=87 // pred_check_branch
          %2365 = sbr.rel (%p2363) target = $region128
        $region127: #{ts_model_forward.1} parent=87 // pred_region
          _
        $region128: #{ts_model_forward.1} parent=87 // pred_fallthru
          _
      $region88: #{ts_model_forward.1} parent=5 // pred_fallthru
        _
      %p2366 = scmp.le.s32.totalorder 2, %s30
      // Predicated region
      $region129: #{ts_model_forward.1} parent=5 // pred_check
        %p2367 = pneg %p2366
      $region130: #{ts_model_forward.1} parent=5 // pred_check_branch
        %2369 = sbr.rel (%p2367) target = $region132
      $region131: #{ts_model_forward.1} parent=5 // pred_region
        %s2370 = ssub.s32 %s30, 2
        // Predicated region
        $region133: #{ts_model_forward.1} parent=131 // pred_check
          %p2371 = pneg %p421
        $region134: #{ts_model_forward.1} parent=131 // pred_check_branch
          %2373 = sbr.rel (%p2371) target = $region136
        $region135: #{ts_model_forward.1} parent=131 // pred_region
          %p2374 = scmp.lt.s32.totalorder %s36, 1
          %s2375 = scalar_select %p2374, %s36, 1
          %s2376 = smul.addr %s2375, 8
          %s2377 = scalar_lea.vmem %s17, %s2376
        $region136: #{ts_model_forward.1} parent=131 // pred_fallthru
          _
      $region132: #{ts_model_forward.1} parent=5 // pred_fallthru
        _
    $region6: #{ts_model_forward.1} parent=1 // loop_footer
      %s34 = sadd.s32 1, %s30
    $region7: #{ts_model_forward.1} parent=1 // loop_footer_branch
      %29 = sbr.rel target = $region3
    $region8: #{ts_model_forward.1} parent=1 // loop_exit
      _
    %2378 = vsyncpa [#allocation3], 1
    %s2379 = scalar_lea.sflag [#allocation3], 1
    %2380 = vsyncpa %s2379, 1
    %2381 = vsyncpa [#allocation5], 1
    %2382 = vsyncpa [#allocation8], 1
    %2383 = vsyncpa [#allocation11], 1
    %2384 = vsyncpa [#allocation14], 1

</llo_original>
